<compile_context>
chip_gen: v5e
topology: v5e:2x2
jax: 0.10.0
libtpu: 0.0.40
codegen_flags: <defaults>
</compile_context>

<pallas_src>
import jax
import jax.numpy as jnp
from jax.experimental import pallas as pl
from jax.experimental.pallas import tpu as pltpu

# ----- problem sizes (small demo shapes) -------------------------------------
B, C, H, W = 2, 4, 16, 16
HC = 8                                  # hidden channels of synthetic denoiser
CW = C * W                              # 64
BH = B * H                              # 32 (batch folded into sublanes)

# ----- config['method']['deq_cal'] -------------------------------------------
GAMMA = 1.0                             # x_gamma
ALPHA = 0.5                             # x_alpha
LAMBD = 2.0                             # x_lambda
SIGMA = 5.0 / 255.0                     # warmup.x_sigma / 255


# =============================================================================
# Fused kernel: dc gradient + gradient step + gradient-step denoiser + scalars
# =============================================================================
def _fused_kernel(xri_ref, thri_ref, thirn_ref, m2_ref, yri_ref,
                  fhr_ref, fhi_ref, bwf_ref, bwa_ref, cs_ref,
                  a1_ref, b1_ref, a2_ref, b2_ref, a2t_ref, a1t_ref,
                  xh_ref, scal_ref):
    f32 = jnp.float32
    dot = lambda a, b: jnp.dot(a, b, preferred_element_type=f32)

    xri = xri_ref[...]                       # (BH, 2W)   [xr | xi]
    thri = thri_ref[...]                     # (BH, 2CW)  [thr | thi]   (coil slabs)
    thirn = thirn_ref[...]                   # (BH, 2CW)  [-thi | thr]
    m2 = m2_ref[...]                         # (BH, 2CW)  [m | m]

    # replicate x across the 2C coil/half lane blocks (in-kernel: no HBM blow-up)
    xr8 = jnp.concatenate([xri[:, :W]] * (2 * C), axis=1)      # (BH, 2CW)
    xi8 = jnp.concatenate([xri[:, W:]] * (2 * C), axis=1)

    # coil images  S = [sr | si],  s_c = theta_c * x
    s = xr8 * thri + xi8 * thirn

    lane = jax.lax.broadcasted_iota(jnp.int32, (BH, 2 * CW), 1)
    sgn = jnp.where(lane < CW, -1.0, 1.0).astype(f32)

    fhr = fhr_ref[...]                       # (BH, BH) batch-block-diag DFT (re)
    fhi = fhi_ref[...]                       # (BH, BH) batch-block-diag DFT (im)

    # ---------------- forward 2-D ortho DFT (complex fused: 3 matmuls) -------
    # roll(s)*sgn = [-si | sr]  ->  t = [Fh_r sr - Fh_i si | Fh_i sr + Fh_r si]
    t = dot(fhr, s) + dot(fhi, pltpu.roll(s, CW, axis=1) * sgn)     # [tr | ti]
    k = dot(t, bwf_ref[...])                                        # [kr | ki]

    # fmult mask + residual against y;  f = 0.5*||fmult(x_old) - y||^2
    r = k * m2 - yri_ref[...]
    f_val = 0.5 * jnp.sum(r * r)

    # ---------------- ftran: adjoint DFT (3 matmuls) + coil combine (1) ------
    r2 = r * m2
    u2 = dot(fhr, r2) - dot(fhi, pltpu.roll(r2, CW, axis=1) * sgn)  # [ur | ui]
    v2 = dot(u2, bwa_ref[...])                                      # [vr | vi]
    # conj(theta)*v, coil-sum and [re | im] packing in one (32,256)@(256,32) dot
    p = jnp.concatenate([thri * v2, thirn * v2], axis=1)            # (BH, 4CW)
    dc = dot(p, cs_ref[...])                                        # (BH, 2W)

    # ---------------- gradient step  x1 = x - gamma*lambd*dc ------------------
    x1 = xri - (GAMMA * LAMBD) * dc

    # ---------------- gradient-step denoiser (conv/ReLU/conv + exact VJP) -----
    # Each conv = ONE matmul: row-shifted copies via sublane roll (XLU) with a
    # per-batch boundary mask (VPU), lane-concatenated against a pre-built
    # (3*cin*W, cout*W) tap matrix (column shift + zero pad + channel mix).
    def shift3(x):
        row = jax.lax.broadcasted_iota(jnp.int32, x.shape, 0) % H
        xu = jnp.where(row == 0, 0.0, pltpu.roll(x, 1, axis=0))           # row r-1
        xd = jnp.where(row == H - 1, 0.0, pltpu.roll(x, BH - 1, axis=0))  # row r+1
        return jnp.concatenate([xu, x, xd], axis=1)

    z = dot(shift3(x1), a1_ref[...]) + b1_ref[...]        # (BH, HC*W) pre-act
    act = jnp.maximum(z, 0.0)
    n = dot(shift3(act), a2_ref[...]) + b2_ref[...]       # (BH, 2W)  N = cnn(x1)

    # v = x1 - N ;  Dg = v - J_N(x1)^T v   (transposed convs + ReLU mask)
    v = x1 - n
    u = jnp.where(z > 0.0, dot(shift3(v), a2t_ref[...]), 0.0)       # (BH, HC*W)
    jtv = dot(shift3(u), a1t_ref[...])                              # (BH, 2W)
    dg = v - jtv

    # x_hat = alpha*(x1 - Dg) + (1-alpha)*x1 = x1 - alpha*Dg
    xh = x1 - ALPHA * dg
    xh_ref[...] = xh

    g_val = 0.5 * jnp.sum(v * v)                          # 0.5||x1 - N||^2 (batch-summed)
    h_val = 0.5 * (ALPHA * ALPHA) * jnp.sum(dg * dg)      # 0.5||x1 - x_hat||^2

    # pack batch-summed f/g/h into one lane-dense (1, 128) store
    lane_s = jax.lax.broadcasted_iota(jnp.int32, (1, 128), 1)
    scal_ref[...] = (jnp.where(lane_s == 0, f_val, 0.0)
                     + jnp.where(lane_s == 1, g_val, 0.0)
                     + jnp.where(lane_s == 2, h_val, 0.0))


# =============================================================================
# One-time precompute (hoisted out of the per-iteration DEQ call)
# =============================================================================
def _dft_mats(n):
    idx = jnp.arange(n, dtype=jnp.float32)
    ang = -2.0 * jnp.pi * jnp.outer(idx, idx) / n
    scale = 1.0 / jnp.sqrt(jnp.float32(n))
    return jnp.cos(ang) * scale, jnp.sin(ang) * scale


def _conv_tap_cat(w):
    """w: (cout, cin, 3, 3) -> (3*cin*W, cout*W) concatenated per-row-offset taps.

    A_ky[ci*W + c, co*W + j] = sum_kx w[co, ci, ky, kx] * [c == j + kx - 1]
    (column shift + zero padding + channel mixing folded into one matmul).
    The three ky blocks are stacked along the contraction dim in [r-1, r, r+1]
    order, matching the kernel's shift3() concatenation.
    """
    jj = jnp.arange(W)
    taps = []
    for ky in range(3):
        acc = jnp.zeros((w.shape[1] * W, w.shape[0] * W), jnp.float32)
        for kx in range(3):
            ind = (jj[:, None] == jj[None, :] + (kx - 1)).astype(jnp.float32)
            acc = acc + jnp.kron(w[:, :, ky, kx].T, ind)
        taps.append(acc)
    return jnp.concatenate(taps, axis=0)


def precompute_consts(w1, b1, w2, b2):
    """Weight-dependent constants: built ONCE, reused every DEQ iteration."""
    f32 = jnp.float32
    # orthonormal DFT matrices; left side block-diag over batch, right over coils
    fhr, fhi = _dft_mats(H)
    fwr, fwi = _dft_mats(W)
    zH = jnp.zeros((H, H), f32)
    FHR = jnp.block([[fhr, zH], [zH, fhr]])                          # (BH, BH)
    FHI = jnp.block([[fhi, zH], [zH, fhi]])
    eye_c = jnp.eye(C, dtype=f32)
    bwr = jnp.kron(eye_c, fwr)                                       # (CW, CW)
    bwi = jnp.kron(eye_c, fwi)
    BWF = jnp.block([[bwr, bwi], [-bwi, bwr]])                       # forward  (128,128)
    BWA = jnp.block([[bwr, -bwi], [bwi, bwr]])                       # adjoint  (128,128)
    # coil-sum + [re|im] packing matrix for [P1 | P2] -> dc   (256, 32)
    onesblk = jnp.tile(jnp.eye(W, dtype=f32), (2 * C, 1))            # (2CW, W)
    zblk = jnp.zeros((2 * CW, W), f32)
    CS = jnp.block([[onesblk, zblk], [zblk, onesblk]])

    # conv-as-matmul tap matrices (forward + transposed/flipped for the VJP)
    A1 = _conv_tap_cat(w1[:, :2])                                    # (96, 128)
    A2 = _conv_tap_cat(w2)                                           # (384, 32)
    w2t = jnp.transpose(w2[:, :, ::-1, ::-1], (1, 0, 2, 3))          # (HC, 2, 3, 3)
    w1t = jnp.transpose(w1[:, :2, ::-1, ::-1], (1, 0, 2, 3))         # (2, HC, 3, 3)
    A2T = _conv_tap_cat(w2t)                                         # (96, 128)
    A1T = _conv_tap_cat(w1t)                                         # (384, 32)

    # bias slabs; the constant sigma input channel of conv1 folds into its bias
    sig_img = jnp.full((1, 1, H, W), SIGMA, f32)
    sig_out = jax.lax.conv_general_dilated(
        sig_img, w1[:, 2:3], (1, 1), 'SAME',
        dimension_numbers=('NCHW', 'OIHW', 'NCHW'))[0]               # (HC, H, W)
    b1_slab = jnp.transpose(sig_out + b1[:, None, None],
                            (1, 0, 2)).reshape(H, HC * W)            # (H, HC*W)
    B1 = jnp.tile(b1_slab, (B, 1))                                   # (BH, HC*W)
    B2 = jnp.tile(jnp.repeat(b2, W)[None, :], (BH, 1))               # (BH, 2W)

    return dict(FHR=FHR, FHI=FHI, BWF=BWF, BWA=BWA, CS=CS,
                A1=A1, B1=B1, A2=A2, B2=B2, A2T=A2T, A1T=A1T)


def precompute_measurement(theta, mask, y):
    """theta/mask/y slabs: fixed across DEQ iterations, built ONCE per sample."""
    f32 = jnp.float32
    thr = jnp.real(theta).astype(f32)
    thi = jnp.imag(theta).astype(f32)
    yr = jnp.real(y).astype(f32)
    yi = jnp.imag(y).astype(f32)
    m = mask.astype(f32)
    # coil-stacked lane slabs with batch folded into sublanes: (BH, CW)
    slab = lambda a: jnp.transpose(a, (0, 2, 1, 3)).reshape(BH, CW)
    thr_s, thi_s = slab(thr), slab(thi)
    yr_s, yi_s = slab(yr), slab(yi)
    m_s = jnp.tile(m, (1, 1, C)).reshape(BH, CW)
    return dict(
        THRI=jnp.concatenate([thr_s, thi_s], axis=1),                # (BH, 2CW)
        THIRN=jnp.concatenate([-thi_s, thr_s], axis=1),
        M2=jnp.concatenate([m_s, m_s], axis=1),
        YRI=jnp.concatenate([yr_s, yi_s], axis=1))


# =============================================================================
# Per-iteration jitted wrapper (minimal: real/imag/reshape + pallas_call)
# =============================================================================
@jax.jit
def image_update_bls(x, meas, consts):
    f32 = jnp.float32
    xr = jnp.real(x).astype(f32).reshape(BH, W)
    xi = jnp.imag(x).astype(f32).reshape(BH, W)
    xri = jnp.concatenate([xr, xi], axis=1)                          # (BH, 2W)

    operands = (xri, meas['THRI'], meas['THIRN'], meas['M2'], meas['YRI'],
                consts['FHR'], consts['FHI'], consts['BWF'], consts['BWA'],
                consts['CS'], consts['A1'], consts['B1'], consts['A2'],
                consts['B2'], consts['A2T'], consts['A1T'])

    full = lambda a: pl.BlockSpec(a.shape, lambda i: (0,) * a.ndim)
    in_specs = [full(a) for a in operands]
    out_specs = (pl.BlockSpec((BH, 2 * W), lambda i: (0, 0)),
                 pl.BlockSpec((1, 128), lambda i: (0, 0)))

    xh, scal = pl.pallas_call(
        _fused_kernel,
        out_shape=(jax.ShapeDtypeStruct((BH, 2 * W), f32),
                   jax.ShapeDtypeStruct((1, 128), f32)),
        grid=(1,),
        in_specs=in_specs,
        out_specs=out_specs,
        compiler_params=pltpu.CompilerParams(
            dimension_semantics=("arbitrary",)),
    )(*operands)

    xh = xh.reshape(B, H, 2 * W)
    x_hat = (xh[..., :W] + 1j * xh[..., W:]).astype(jnp.complex64)

    # scalar bookkeeping (mirrors F / f / regul of the PyTorch forward)
    f = scal[0, 0]
    g = scal[0, 1]
    h = scal[0, 2]
    regul = (1.0 / LAMBD) * (g - h)
    F = f + regul
    return x_hat, F, f, regul


# =============================================================================
if __name__ == "__main__":
    key = jax.random.PRNGKey(0)
    ks = jax.random.split(key, 10)

    x = (jax.random.normal(ks[0], (B, H, W)) +
         1j * jax.random.normal(ks[1], (B, H, W))).astype(jnp.complex64)
    theta = (jax.random.normal(ks[2], (B, C, H, W)) +
             1j * jax.random.normal(ks[3], (B, C, H, W))).astype(jnp.complex64)
    theta = theta / jnp.sqrt(jnp.sum(jnp.abs(theta) ** 2, axis=1, keepdims=True) + 1e-6)
    mask = (jax.random.uniform(ks[4], (B, H, W)) < 0.4).astype(jnp.float32)
    y = ((jax.random.normal(ks[5], (B, C, H, W)) +
          1j * jax.random.normal(ks[6], (B, C, H, W))).astype(jnp.complex64)
         * mask[:, None].astype(jnp.complex64))

    # deterministic synthetic denoiser parameters
    w1 = 0.1 * jax.random.normal(ks[7], (HC, 3, 3, 3), jnp.float32)
    b1 = 0.01 * jax.random.normal(ks[8], (HC,), jnp.float32)
    w2 = 0.1 * jax.random.normal(ks[9], (2, HC, 3, 3), jnp.float32)
    b2 = jnp.zeros((2,), jnp.float32)

    # hoisted setup (once per weight set / once per measured sample)
    consts = precompute_consts(w1, b1, w2, b2)
    meas = precompute_measurement(theta, mask, y)

    x_hat, F, f, regul = image_update_bls(x, meas, consts)
    jax.block_until_ready((x_hat, F, f, regul))

    assert x_hat.shape == (B, H, W) and x_hat.dtype == jnp.complex64
    assert jnp.all(jnp.isfinite(jnp.real(x_hat))) and jnp.all(jnp.isfinite(jnp.imag(x_hat)))
    assert jnp.isfinite(F) and jnp.isfinite(f) and jnp.isfinite(regul)
    print("KERNEL_OK")
</pallas_src>

<mosaic_0001>
module attributes {stable_mosaic.version = 11 : i64} {
  func.func @_fused_kernel(%arg0: i32, %arg1: memref<32x32xf32, #tpu.memory_space<vmem>>, %arg2: memref<32x128xf32, #tpu.memory_space<vmem>>, %arg3: memref<32x128xf32, #tpu.memory_space<vmem>>, %arg4: memref<32x128xf32, #tpu.memory_space<vmem>>, %arg5: memref<32x128xf32, #tpu.memory_space<vmem>>, %arg6: memref<32x32xf32, #tpu.memory_space<vmem>>, %arg7: memref<32x32xf32, #tpu.memory_space<vmem>>, %arg8: memref<128x128xf32, #tpu.memory_space<vmem>>, %arg9: memref<128x128xf32, #tpu.memory_space<vmem>>, %arg10: memref<256x32xf32, #tpu.memory_space<vmem>>, %arg11: memref<96x128xf32, #tpu.memory_space<vmem>>, %arg12: memref<32x128xf32, #tpu.memory_space<vmem>>, %arg13: memref<384x32xf32, #tpu.memory_space<vmem>>, %arg14: memref<32x32xf32, #tpu.memory_space<vmem>>, %arg15: memref<96x128xf32, #tpu.memory_space<vmem>>, %arg16: memref<384x32xf32, #tpu.memory_space<vmem>>, %arg17: memref<32x32xf32, #tpu.memory_space<vmem>>, %arg18: memref<1x128xf32, #tpu.memory_space<vmem>>) attributes {dimension_semantics = [#tpu.dimension_semantics<arbitrary>], iteration_bounds = array<i64: 1>, scalar_prefetch = 0 : i64, scratch_operands = 0 : i64, tpu.core_type = #tpu.core_type<tc>, window_params = [{pipeline_mode = #tpu.pipeline_mode<synchronous>, transform_indices = @transform_0, window_bounds = array<i64: 32, 32>}, {pipeline_mode = #tpu.pipeline_mode<synchronous>, transform_indices = @transform_1, window_bounds = array<i64: 32, 128>}, {pipeline_mode = #tpu.pipeline_mode<synchronous>, transform_indices = @transform_2, window_bounds = array<i64: 32, 128>}, {pipeline_mode = #tpu.pipeline_mode<synchronous>, transform_indices = @transform_3, window_bounds = array<i64: 32, 128>}, {pipeline_mode = #tpu.pipeline_mode<synchronous>, transform_indices = @transform_4, window_bounds = array<i64: 32, 128>}, {pipeline_mode = #tpu.pipeline_mode<synchronous>, transform_indices = @transform_5, window_bounds = array<i64: 32, 32>}, {pipeline_mode = #tpu.pipeline_mode<synchronous>, transform_indices = @transform_6, window_bounds = array<i64: 32, 32>}, {pipeline_mode = #tpu.pipeline_mode<synchronous>, transform_indices = @transform_7, window_bounds = array<i64: 128, 128>}, {pipeline_mode = #tpu.pipeline_mode<synchronous>, transform_indices = @transform_8, window_bounds = array<i64: 128, 128>}, {pipeline_mode = #tpu.pipeline_mode<synchronous>, transform_indices = @transform_9, window_bounds = array<i64: 256, 32>}, {pipeline_mode = #tpu.pipeline_mode<synchronous>, transform_indices = @transform_10, window_bounds = array<i64: 96, 128>}, {pipeline_mode = #tpu.pipeline_mode<synchronous>, transform_indices = @transform_11, window_bounds = array<i64: 32, 128>}, {pipeline_mode = #tpu.pipeline_mode<synchronous>, transform_indices = @transform_12, window_bounds = array<i64: 384, 32>}, {pipeline_mode = #tpu.pipeline_mode<synchronous>, transform_indices = @transform_13, window_bounds = array<i64: 32, 32>}, {pipeline_mode = #tpu.pipeline_mode<synchronous>, transform_indices = @transform_14, window_bounds = array<i64: 96, 128>}, {pipeline_mode = #tpu.pipeline_mode<synchronous>, transform_indices = @transform_15, window_bounds = array<i64: 384, 32>}, {pipeline_mode = #tpu.pipeline_mode<synchronous>, transform_indices = @transform_16, window_bounds = array<i64: 32, 32>}, {pipeline_mode = #tpu.pipeline_mode<synchronous>, transform_indices = @transform_17, window_bounds = array<i64: 1, 128>}]} {
    %c0 = arith.constant 0 : index
    %c0_0 = arith.constant 0 : index
    %0 = vector.load %arg1[%c0, %c0_0] : memref<32x32xf32, #tpu.memory_space<vmem>>, vector<32x32xf32>
    %c0_1 = arith.constant 0 : index
    %c0_2 = arith.constant 0 : index
    %1 = vector.load %arg2[%c0_1, %c0_2] : memref<32x128xf32, #tpu.memory_space<vmem>>, vector<32x128xf32>
    %c0_3 = arith.constant 0 : index
    %c0_4 = arith.constant 0 : index
    %2 = vector.load %arg3[%c0_3, %c0_4] : memref<32x128xf32, #tpu.memory_space<vmem>>, vector<32x128xf32>
    %c0_5 = arith.constant 0 : index
    %c0_6 = arith.constant 0 : index
    %3 = vector.load %arg4[%c0_5, %c0_6] : memref<32x128xf32, #tpu.memory_space<vmem>>, vector<32x128xf32>
    %4 = vector.extract_strided_slice %0 {offsets = [0, 0], sizes = [32, 16], strides = [1, 1]} : vector<32x32xf32> to vector<32x16xf32>
    %5 = tpu.concatenate %4, %4, %4, %4, %4, %4, %4, %4 in 1 : vector<32x16xf32>, vector<32x16xf32>, vector<32x16xf32>, vector<32x16xf32>, vector<32x16xf32>, vector<32x16xf32>, vector<32x16xf32>, vector<32x16xf32> -> vector<32x128xf32>
    %6 = vector.extract_strided_slice %0 {offsets = [0, 16], sizes = [32, 16], strides = [1, 1]} : vector<32x32xf32> to vector<32x16xf32>
    %7 = tpu.concatenate %6, %6, %6, %6, %6, %6, %6, %6 in 1 : vector<32x16xf32>, vector<32x16xf32>, vector<32x16xf32>, vector<32x16xf32>, vector<32x16xf32>, vector<32x16xf32>, vector<32x16xf32>, vector<32x16xf32> -> vector<32x128xf32>
    %8 = arith.mulf %5, %1 : vector<32x128xf32>
    %9 = arith.mulf %7, %2 : vector<32x128xf32>
    %10 = arith.addf %8, %9 : vector<32x128xf32>
    %11 = tpu.iota {dimensions = array<i32: 1>} : vector<32x128xi32>
    %c64_i32 = arith.constant 64 : i32
    %12 = vector.broadcast %c64_i32 : i32 to vector<32x128xi32>
    %13 = arith.cmpi slt, %11, %12 : vector<32x128xi32>
    %cst = arith.constant -1.000000e+00 : f32
    %cst_7 = arith.constant 1.000000e+00 : f32
    %14 = vector.broadcast %cst : f32 to vector<32x128xf32>
    %15 = vector.broadcast %cst_7 : f32 to vector<32x128xf32>
    %16 = arith.select %13, %14, %15 : vector<32x128xi1>, vector<32x128xf32>
    %c0_8 = arith.constant 0 : index
    %c0_9 = arith.constant 0 : index
    %17 = vector.load %arg6[%c0_8, %c0_9] : memref<32x32xf32, #tpu.memory_space<vmem>>, vector<32x32xf32>
    %c0_10 = arith.constant 0 : index
    %c0_11 = arith.constant 0 : index
    %18 = vector.load %arg7[%c0_10, %c0_11] : memref<32x32xf32, #tpu.memory_space<vmem>>, vector<32x32xf32>
    %cst_12 = arith.constant dense<0.000000e+00> : vector<32x128xf32>
    %19 = tpu.matmul %17, %10, %cst_12 {dimension_numbers = #tpu.dot_dimension_numbers<[1], [0], [0], [1], [0, 0, 1, 1], [], []>} : vector<32x32xf32>, vector<32x128xf32>, vector<32x128xf32> -> vector<32x128xf32>
    %c64_i32_13 = arith.constant 64 : i32
    %20 = tpu.dynamic_rotate %10 by %c64_i32_13 dim 1 : vector<32x128xf32>, i32 -> vector<32x128xf32>
    %21 = arith.mulf %20, %16 : vector<32x128xf32>
    %cst_14 = arith.constant dense<0.000000e+00> : vector<32x128xf32>
    %22 = tpu.matmul %18, %21, %cst_14 {dimension_numbers = #tpu.dot_dimension_numbers<[1], [0], [0], [1], [0, 0, 1, 1], [], []>} : vector<32x32xf32>, vector<32x128xf32>, vector<32x128xf32> -> vector<32x128xf32>
    %23 = arith.addf %19, %22 : vector<32x128xf32>
    %c0_15 = arith.constant 0 : index
    %c0_16 = arith.constant 0 : index
    %24 = vector.load %arg8[%c0_15, %c0_16] : memref<128x128xf32, #tpu.memory_space<vmem>>, vector<128x128xf32>
    %cst_17 = arith.constant dense<0.000000e+00> : vector<32x128xf32>
    %25 = tpu.matmul %23, %24, %cst_17 {dimension_numbers = #tpu.dot_dimension_numbers<[1], [0], [0], [1], [0, 0, 1, 1], [], []>} : vector<32x128xf32>, vector<128x128xf32>, vector<32x128xf32> -> vector<32x128xf32>
    %26 = arith.mulf %25, %3 : vector<32x128xf32>
    %c0_18 = arith.constant 0 : index
    %c0_19 = arith.constant 0 : index
    %27 = vector.load %arg5[%c0_18, %c0_19] : memref<32x128xf32, #tpu.memory_space<vmem>>, vector<32x128xf32>
    %28 = arith.subf %26, %27 : vector<32x128xf32>
    %29 = arith.mulf %28, %28 : vector<32x128xf32>
    %30 = vector.shape_cast %29 : vector<32x128xf32> to vector<1x32x128xf32>
    %cst_20 = arith.constant dense<0.000000e+00> : vector<1xf32>
    %31 = vector.multi_reduction <add>, %30, %cst_20 [1, 2] : vector<1x32x128xf32> to vector<1xf32>
    %32 = vector.shape_cast %31 : vector<1xf32> to vector<1x1x1xf32>
    %33 = vector.extract %32[0, 0, 0] : f32 from vector<1x1x1xf32>
    %cst_21 = arith.constant 5.000000e-01 : f32
    %34 = arith.mulf %cst_21, %33 : f32
    %35 = arith.mulf %28, %3 : vector<32x128xf32>
    %cst_22 = arith.constant dense<0.000000e+00> : vector<32x128xf32>
    %36 = tpu.matmul %17, %35, %cst_22 {dimension_numbers = #tpu.dot_dimension_numbers<[1], [0], [0], [1], [0, 0, 1, 1], [], []>} : vector<32x32xf32>, vector<32x128xf32>, vector<32x128xf32> -> vector<32x128xf32>
    %c64_i32_23 = arith.constant 64 : i32
    %37 = tpu.dynamic_rotate %35 by %c64_i32_23 dim 1 : vector<32x128xf32>, i32 -> vector<32x128xf32>
    %38 = arith.mulf %37, %16 : vector<32x128xf32>
    %cst_24 = arith.constant dense<0.000000e+00> : vector<32x128xf32>
    %39 = tpu.matmul %18, %38, %cst_24 {dimension_numbers = #tpu.dot_dimension_numbers<[1], [0], [0], [1], [0, 0, 1, 1], [], []>} : vector<32x32xf32>, vector<32x128xf32>, vector<32x128xf32> -> vector<32x128xf32>
    %40 = arith.subf %36, %39 : vector<32x128xf32>
    %c0_25 = arith.constant 0 : index
    %c0_26 = arith.constant 0 : index
    %41 = vector.load %arg9[%c0_25, %c0_26] : memref<128x128xf32, #tpu.memory_space<vmem>>, vector<128x128xf32>
    %cst_27 = arith.constant dense<0.000000e+00> : vector<32x128xf32>
    %42 = tpu.matmul %40, %41, %cst_27 {dimension_numbers = #tpu.dot_dimension_numbers<[1], [0], [0], [1], [0, 0, 1, 1], [], []>} : vector<32x128xf32>, vector<128x128xf32>, vector<32x128xf32> -> vector<32x128xf32>
    %43 = arith.mulf %1, %42 : vector<32x128xf32>
    %44 = arith.mulf %2, %42 : vector<32x128xf32>
    %45 = tpu.concatenate %43, %44 in 1 : vector<32x128xf32>, vector<32x128xf32> -> vector<32x256xf32>
    %c0_28 = arith.constant 0 : index
    %c0_29 = arith.constant 0 : index
    %46 = vector.load %arg10[%c0_28, %c0_29] : memref<256x32xf32, #tpu.memory_space<vmem>>, vector<256x32xf32>
    %cst_30 = arith.constant dense<0.000000e+00> : vector<32x32xf32>
    %47 = tpu.matmul %45, %46, %cst_30 {dimension_numbers = #tpu.dot_dimension_numbers<[1], [0], [0], [1], [0, 0, 1, 1], [], []>} : vector<32x256xf32>, vector<256x32xf32>, vector<32x32xf32> -> vector<32x32xf32>
    %cst_31 = arith.constant 2.000000e+00 : f32
    %48 = vector.broadcast %cst_31 : f32 to vector<32x32xf32>
    %49 = arith.mulf %48, %47 : vector<32x32xf32>
    %50 = arith.subf %0, %49 : vector<32x32xf32>
    %51 = tpu.iota {dimensions = array<i32: 0>} : vector<32x32xi32>
    %c16_i32 = arith.constant 16 : i32
    %c0_i32 = arith.constant 0 : i32
    %52 = arith.cmpi eq, %c16_i32, %c0_i32 : i32
    %c1_i32 = arith.constant 1 : i32
    %53 = arith.select %52, %c1_i32, %c16_i32 : i32
    %54 = vector.broadcast %53 : i32 to vector<32x32xi32>
    %55 = arith.remsi %51, %54 : vector<32x32xi32>
    %c0_i32_32 = arith.constant 0 : i32
    %56 = vector.broadcast %c0_i32_32 : i32 to vector<32x32xi32>
    %57 = arith.cmpi ne, %55, %56 : vector<32x32xi32>
    %c0_i32_33 = arith.constant 0 : i32
    %58 = vector.broadcast %c0_i32_33 : i32 to vector<32x32xi32>
    %59 = arith.cmpi slt, %55, %58 : vector<32x32xi32>
    %c0_i32_34 = arith.constant 0 : i32
    %60 = arith.cmpi slt, %53, %c0_i32_34 : i32
    %61 = vector.broadcast %60 : i1 to vector<32x32xi1>
    %62 = vector.broadcast %61 : vector<32x32xi1> to vector<32x32xi1>
    %63 = arith.xori %59, %62 : vector<32x32xi1>
    %64 = arith.andi %63, %57 : vector<32x32xi1>
    %65 = vector.broadcast %53 : i32 to vector<32x32xi32>
    %66 = arith.addi %55, %65 : vector<32x32xi32>
    %67 = arith.select %64, %66, %55 : vector<32x32xi1>, vector<32x32xi32>
    %c0_i32_35 = arith.constant 0 : i32
    %68 = vector.broadcast %c0_i32_35 : i32 to vector<32x32xi32>
    %69 = arith.cmpi eq, %67, %68 : vector<32x32xi32>
    %c1_i32_36 = arith.constant 1 : i32
    %70 = tpu.dynamic_rotate %50 by %c1_i32_36 dim 0 : vector<32x32xf32>, i32 -> vector<32x32xf32>
    %cst_37 = arith.constant 0.000000e+00 : f32
    %71 = vector.broadcast %cst_37 : f32 to vector<32x32xf32>
    %72 = arith.select %69, %71, %70 : vector<32x32xi1>, vector<32x32xf32>
    %c15_i32 = arith.constant 15 : i32
    %73 = vector.broadcast %c15_i32 : i32 to vector<32x32xi32>
    %74 = arith.cmpi eq, %67, %73 : vector<32x32xi32>
    %c31_i32 = arith.constant 31 : i32
    %75 = tpu.dynamic_rotate %50 by %c31_i32 dim 0 : vector<32x32xf32>, i32 -> vector<32x32xf32>
    %cst_38 = arith.constant 0.000000e+00 : f32
    %76 = vector.broadcast %cst_38 : f32 to vector<32x32xf32>
    %77 = arith.select %74, %76, %75 : vector<32x32xi1>, vector<32x32xf32>
    %78 = tpu.concatenate %72, %50, %77 in 1 : vector<32x32xf32>, vector<32x32xf32>, vector<32x32xf32> -> vector<32x96xf32>
    %c0_39 = arith.constant 0 : index
    %c0_40 = arith.constant 0 : index
    %79 = vector.load %arg11[%c0_39, %c0_40] : memref<96x128xf32, #tpu.memory_space<vmem>>, vector<96x128xf32>
    %cst_41 = arith.constant dense<0.000000e+00> : vector<32x128xf32>
    %80 = tpu.matmul %78, %79, %cst_41 {dimension_numbers = #tpu.dot_dimension_numbers<[1], [0], [0], [1], [0, 0, 1, 1], [], []>} : vector<32x96xf32>, vector<96x128xf32>, vector<32x128xf32> -> vector<32x128xf32>
    %c0_42 = arith.constant 0 : index
    %c0_43 = arith.constant 0 : index
    %81 = vector.load %arg12[%c0_42, %c0_43] : memref<32x128xf32, #tpu.memory_space<vmem>>, vector<32x128xf32>
    %82 = arith.addf %80, %81 : vector<32x128xf32>
    %cst_44 = arith.constant 0.000000e+00 : f32
    %83 = vector.broadcast %cst_44 : f32 to vector<32x128xf32>
    %84 = arith.maximumf %82, %83 : vector<32x128xf32>
    %85 = tpu.iota {dimensions = array<i32: 0>} : vector<32x128xi32>
    %c16_i32_45 = arith.constant 16 : i32
    %c0_i32_46 = arith.constant 0 : i32
    %86 = arith.cmpi eq, %c16_i32_45, %c0_i32_46 : i32
    %c1_i32_47 = arith.constant 1 : i32
    %87 = arith.select %86, %c1_i32_47, %c16_i32_45 : i32
    %88 = vector.broadcast %87 : i32 to vector<32x128xi32>
    %89 = arith.remsi %85, %88 : vector<32x128xi32>
    %c0_i32_48 = arith.constant 0 : i32
    %90 = vector.broadcast %c0_i32_48 : i32 to vector<32x128xi32>
    %91 = arith.cmpi ne, %89, %90 : vector<32x128xi32>
    %c0_i32_49 = arith.constant 0 : i32
    %92 = vector.broadcast %c0_i32_49 : i32 to vector<32x128xi32>
    %93 = arith.cmpi slt, %89, %92 : vector<32x128xi32>
    %c0_i32_50 = arith.constant 0 : i32
    %94 = arith.cmpi slt, %87, %c0_i32_50 : i32
    %95 = vector.broadcast %94 : i1 to vector<32x128xi1>
    %96 = vector.broadcast %95 : vector<32x128xi1> to vector<32x128xi1>
    %97 = arith.xori %93, %96 : vector<32x128xi1>
    %98 = arith.andi %97, %91 : vector<32x128xi1>
    %99 = vector.broadcast %87 : i32 to vector<32x128xi32>
    %100 = arith.addi %89, %99 : vector<32x128xi32>
    %101 = arith.select %98, %100, %89 : vector<32x128xi1>, vector<32x128xi32>
    %c0_i32_51 = arith.constant 0 : i32
    %102 = vector.broadcast %c0_i32_51 : i32 to vector<32x128xi32>
    %103 = arith.cmpi eq, %101, %102 : vector<32x128xi32>
    %c1_i32_52 = arith.constant 1 : i32
    %104 = tpu.dynamic_rotate %84 by %c1_i32_52 dim 0 : vector<32x128xf32>, i32 -> vector<32x128xf32>
    %cst_53 = arith.constant 0.000000e+00 : f32
    %105 = vector.broadcast %cst_53 : f32 to vector<32x128xf32>
    %106 = arith.select %103, %105, %104 : vector<32x128xi1>, vector<32x128xf32>
    %c15_i32_54 = arith.constant 15 : i32
    %107 = vector.broadcast %c15_i32_54 : i32 to vector<32x128xi32>
    %108 = arith.cmpi eq, %101, %107 : vector<32x128xi32>
    %c31_i32_55 = arith.constant 31 : i32
    %109 = tpu.dynamic_rotate %84 by %c31_i32_55 dim 0 : vector<32x128xf32>, i32 -> vector<32x128xf32>
    %cst_56 = arith.constant 0.000000e+00 : f32
    %110 = vector.broadcast %cst_56 : f32 to vector<32x128xf32>
    %111 = arith.select %108, %110, %109 : vector<32x128xi1>, vector<32x128xf32>
    %112 = tpu.concatenate %106, %84, %111 in 1 : vector<32x128xf32>, vector<32x128xf32>, vector<32x128xf32> -> vector<32x384xf32>
    %c0_57 = arith.constant 0 : index
    %c0_58 = arith.constant 0 : index
    %113 = vector.load %arg13[%c0_57, %c0_58] : memref<384x32xf32, #tpu.memory_space<vmem>>, vector<384x32xf32>
    %cst_59 = arith.constant dense<0.000000e+00> : vector<32x32xf32>
    %114 = tpu.matmul %112, %113, %cst_59 {dimension_numbers = #tpu.dot_dimension_numbers<[1], [0], [0], [1], [0, 0, 1, 1], [], []>} : vector<32x384xf32>, vector<384x32xf32>, vector<32x32xf32> -> vector<32x32xf32>
    %c0_60 = arith.constant 0 : index
    %c0_61 = arith.constant 0 : index
    %115 = vector.load %arg14[%c0_60, %c0_61] : memref<32x32xf32, #tpu.memory_space<vmem>>, vector<32x32xf32>
    %116 = arith.addf %114, %115 : vector<32x32xf32>
    %117 = arith.subf %50, %116 : vector<32x32xf32>
    %cst_62 = arith.constant 0.000000e+00 : f32
    %118 = vector.broadcast %cst_62 : f32 to vector<32x128xf32>
    %119 = arith.cmpf ogt, %82, %118 : vector<32x128xf32>
    %120 = tpu.iota {dimensions = array<i32: 0>} : vector<32x32xi32>
    %c16_i32_63 = arith.constant 16 : i32
    %c0_i32_64 = arith.constant 0 : i32
    %121 = arith.cmpi eq, %c16_i32_63, %c0_i32_64 : i32
    %c1_i32_65 = arith.constant 1 : i32
    %122 = arith.select %121, %c1_i32_65, %c16_i32_63 : i32
    %123 = vector.broadcast %122 : i32 to vector<32x32xi32>
    %124 = arith.remsi %120, %123 : vector<32x32xi32>
    %c0_i32_66 = arith.constant 0 : i32
    %125 = vector.broadcast %c0_i32_66 : i32 to vector<32x32xi32>
    %126 = arith.cmpi ne, %124, %125 : vector<32x32xi32>
    %c0_i32_67 = arith.constant 0 : i32
    %127 = vector.broadcast %c0_i32_67 : i32 to vector<32x32xi32>
    %128 = arith.cmpi slt, %124, %127 : vector<32x32xi32>
    %c0_i32_68 = arith.constant 0 : i32
    %129 = arith.cmpi slt, %122, %c0_i32_68 : i32
    %130 = vector.broadcast %129 : i1 to vector<32x32xi1>
    %131 = vector.broadcast %130 : vector<32x32xi1> to vector<32x32xi1>
    %132 = arith.xori %128, %131 : vector<32x32xi1>
    %133 = arith.andi %132, %126 : vector<32x32xi1>
    %134 = vector.broadcast %122 : i32 to vector<32x32xi32>
    %135 = arith.addi %124, %134 : vector<32x32xi32>
    %136 = arith.select %133, %135, %124 : vector<32x32xi1>, vector<32x32xi32>
    %c0_i32_69 = arith.constant 0 : i32
    %137 = vector.broadcast %c0_i32_69 : i32 to vector<32x32xi32>
    %138 = arith.cmpi eq, %136, %137 : vector<32x32xi32>
    %c1_i32_70 = arith.constant 1 : i32
    %139 = tpu.dynamic_rotate %117 by %c1_i32_70 dim 0 : vector<32x32xf32>, i32 -> vector<32x32xf32>
    %cst_71 = arith.constant 0.000000e+00 : f32
    %140 = vector.broadcast %cst_71 : f32 to vector<32x32xf32>
    %141 = arith.select %138, %140, %139 : vector<32x32xi1>, vector<32x32xf32>
    %c15_i32_72 = arith.constant 15 : i32
    %142 = vector.broadcast %c15_i32_72 : i32 to vector<32x32xi32>
    %143 = arith.cmpi eq, %136, %142 : vector<32x32xi32>
    %c31_i32_73 = arith.constant 31 : i32
    %144 = tpu.dynamic_rotate %117 by %c31_i32_73 dim 0 : vector<32x32xf32>, i32 -> vector<32x32xf32>
    %cst_74 = arith.constant 0.000000e+00 : f32
    %145 = vector.broadcast %cst_74 : f32 to vector<32x32xf32>
    %146 = arith.select %143, %145, %144 : vector<32x32xi1>, vector<32x32xf32>
    %147 = tpu.concatenate %141, %117, %146 in 1 : vector<32x32xf32>, vector<32x32xf32>, vector<32x32xf32> -> vector<32x96xf32>
    %c0_75 = arith.constant 0 : index
    %c0_76 = arith.constant 0 : index
    %148 = vector.load %arg15[%c0_75, %c0_76] : memref<96x128xf32, #tpu.memory_space<vmem>>, vector<96x128xf32>
    %cst_77 = arith.constant dense<0.000000e+00> : vector<32x128xf32>
    %149 = tpu.matmul %147, %148, %cst_77 {dimension_numbers = #tpu.dot_dimension_numbers<[1], [0], [0], [1], [0, 0, 1, 1], [], []>} : vector<32x96xf32>, vector<96x128xf32>, vector<32x128xf32> -> vector<32x128xf32>
    %cst_78 = arith.constant 0.000000e+00 : f32
    %150 = vector.broadcast %cst_78 : f32 to vector<32x128xf32>
    %151 = arith.select %119, %149, %150 : vector<32x128xi1>, vector<32x128xf32>
    %152 = tpu.iota {dimensions = array<i32: 0>} : vector<32x128xi32>
    %c16_i32_79 = arith.constant 16 : i32
    %c0_i32_80 = arith.constant 0 : i32
    %153 = arith.cmpi eq, %c16_i32_79, %c0_i32_80 : i32
    %c1_i32_81 = arith.constant 1 : i32
    %154 = arith.select %153, %c1_i32_81, %c16_i32_79 : i32
    %155 = vector.broadcast %154 : i32 to vector<32x128xi32>
    %156 = arith.remsi %152, %155 : vector<32x128xi32>
    %c0_i32_82 = arith.constant 0 : i32
    %157 = vector.broadcast %c0_i32_82 : i32 to vector<32x128xi32>
    %158 = arith.cmpi ne, %156, %157 : vector<32x128xi32>
    %c0_i32_83 = arith.constant 0 : i32
    %159 = vector.broadcast %c0_i32_83 : i32 to vector<32x128xi32>
    %160 = arith.cmpi slt, %156, %159 : vector<32x128xi32>
    %c0_i32_84 = arith.constant 0 : i32
    %161 = arith.cmpi slt, %154, %c0_i32_84 : i32
    %162 = vector.broadcast %161 : i1 to vector<32x128xi1>
    %163 = vector.broadcast %162 : vector<32x128xi1> to vector<32x128xi1>
    %164 = arith.xori %160, %163 : vector<32x128xi1>
    %165 = arith.andi %164, %158 : vector<32x128xi1>
    %166 = vector.broadcast %154 : i32 to vector<32x128xi32>
    %167 = arith.addi %156, %166 : vector<32x128xi32>
    %168 = arith.select %165, %167, %156 : vector<32x128xi1>, vector<32x128xi32>
    %c0_i32_85 = arith.constant 0 : i32
    %169 = vector.broadcast %c0_i32_85 : i32 to vector<32x128xi32>
    %170 = arith.cmpi eq, %168, %169 : vector<32x128xi32>
    %c1_i32_86 = arith.constant 1 : i32
    %171 = tpu.dynamic_rotate %151 by %c1_i32_86 dim 0 : vector<32x128xf32>, i32 -> vector<32x128xf32>
    %cst_87 = arith.constant 0.000000e+00 : f32
    %172 = vector.broadcast %cst_87 : f32 to vector<32x128xf32>
    %173 = arith.select %170, %172, %171 : vector<32x128xi1>, vector<32x128xf32>
    %c15_i32_88 = arith.constant 15 : i32
    %174 = vector.broadcast %c15_i32_88 : i32 to vector<32x128xi32>
    %175 = arith.cmpi eq, %168, %174 : vector<32x128xi32>
    %c31_i32_89 = arith.constant 31 : i32
    %176 = tpu.dynamic_rotate %151 by %c31_i32_89 dim 0 : vector<32x128xf32>, i32 -> vector<32x128xf32>
    %cst_90 = arith.constant 0.000000e+00 : f32
    %177 = vector.broadcast %cst_90 : f32 to vector<32x128xf32>
    %178 = arith.select %175, %177, %176 : vector<32x128xi1>, vector<32x128xf32>
    %179 = tpu.concatenate %173, %151, %178 in 1 : vector<32x128xf32>, vector<32x128xf32>, vector<32x128xf32> -> vector<32x384xf32>
    %c0_91 = arith.constant 0 : index
    %c0_92 = arith.constant 0 : index
    %180 = vector.load %arg16[%c0_91, %c0_92] : memref<384x32xf32, #tpu.memory_space<vmem>>, vector<384x32xf32>
    %cst_93 = arith.constant dense<0.000000e+00> : vector<32x32xf32>
    %181 = tpu.matmul %179, %180, %cst_93 {dimension_numbers = #tpu.dot_dimension_numbers<[1], [0], [0], [1], [0, 0, 1, 1], [], []>} : vector<32x384xf32>, vector<384x32xf32>, vector<32x32xf32> -> vector<32x32xf32>
    %182 = arith.subf %117, %181 : vector<32x32xf32>
    %cst_94 = arith.constant 5.000000e-01 : f32
    %183 = vector.broadcast %cst_94 : f32 to vector<32x32xf32>
    %184 = arith.mulf %183, %182 : vector<32x32xf32>
    %185 = arith.subf %50, %184 : vector<32x32xf32>
    %c0_95 = arith.constant 0 : index
    %c0_96 = arith.constant 0 : index
    %186 = vector.load %arg17[%c0_95, %c0_96] : memref<32x32xf32, #tpu.memory_space<vmem>>, vector<32x32xf32>
    tpu.vector_store %arg17[%c0_95, %c0_96], %185 {strides = array<i32>} : memref<32x32xf32, #tpu.memory_space<vmem>>, vector<32x32xf32>,
    %187 = arith.mulf %117, %117 : vector<32x32xf32>
    %188 = vector.shape_cast %187 : vector<32x32xf32> to vector<1x32x32xf32>
    %cst_97 = arith.constant dense<0.000000e+00> : vector<1xf32>
    %189 = vector.multi_reduction <add>, %188, %cst_97 [1, 2] : vector<1x32x32xf32> to vector<1xf32>
    %190 = vector.shape_cast %189 : vector<1xf32> to vector<1x1x1xf32>
    %191 = vector.extract %190[0, 0, 0] : f32 from vector<1x1x1xf32>
    %cst_98 = arith.constant 5.000000e-01 : f32
    %192 = arith.mulf %cst_98, %191 : f32
    %193 = arith.mulf %182, %182 : vector<32x32xf32>
    %194 = vector.shape_cast %193 : vector<32x32xf32> to vector<1x32x32xf32>
    %cst_99 = arith.constant dense<0.000000e+00> : vector<1xf32>
    %195 = vector.multi_reduction <add>, %194, %cst_99 [1, 2] : vector<1x32x32xf32> to vector<1xf32>
    %196 = vector.shape_cast %195 : vector<1xf32> to vector<1x1x1xf32>
    %197 = vector.extract %196[0, 0, 0] : f32 from vector<1x1x1xf32>
    %cst_100 = arith.constant 1.250000e-01 : f32
    %198 = arith.mulf %cst_100, %197 : f32
    %199 = tpu.iota {dimensions = array<i32: 1>} : vector<1x128xi32>
    %c0_i32_101 = arith.constant 0 : i32
    %200 = vector.broadcast %c0_i32_101 : i32 to vector<1x128xi32>
    %201 = arith.cmpi eq, %199, %200 : vector<1x128xi32>
    %cst_102 = arith.constant 0.000000e+00 : f32
    %202 = vector.broadcast %34 : f32 to vector<1x128xf32>
    %203 = vector.broadcast %cst_102 : f32 to vector<1x128xf32>
    %204 = arith.select %201, %202, %203 : vector<1x128xi1>, vector<1x128xf32>
    %c1_i32_103 = arith.constant 1 : i32
    %205 = vector.broadcast %c1_i32_103 : i32 to vector<1x128xi32>
    %206 = arith.cmpi eq, %199, %205 : vector<1x128xi32>
    %cst_104 = arith.constant 0.000000e+00 : f32
    %207 = vector.broadcast %192 : f32 to vector<1x128xf32>
    %208 = vector.broadcast %cst_104 : f32 to vector<1x128xf32>
    %209 = arith.select %206, %207, %208 : vector<1x128xi1>, vector<1x128xf32>
    %210 = arith.addf %204, %209 : vector<1x128xf32>
    %c2_i32 = arith.constant 2 : i32
    %211 = vector.broadcast %c2_i32 : i32 to vector<1x128xi32>
    %212 = arith.cmpi eq, %199, %211 : vector<1x128xi32>
    %cst_105 = arith.constant 0.000000e+00 : f32
    %213 = vector.broadcast %198 : f32 to vector<1x128xf32>
    %214 = vector.broadcast %cst_105 : f32 to vector<1x128xf32>
    %215 = arith.select %212, %213, %214 : vector<1x128xi1>, vector<1x128xf32>
    %216 = arith.addf %210, %215 : vector<1x128xf32>
    %c0_106 = arith.constant 0 : index
    %c0_107 = arith.constant 0 : index
    %217 = vector.load %arg18[%c0_106, %c0_107] : memref<1x128xf32, #tpu.memory_space<vmem>>, vector<1x128xf32>
    tpu.vector_store %arg18[%c0_106, %c0_107], %216 {strides = array<i32>} : memref<1x128xf32, #tpu.memory_space<vmem>>, vector<1x128xf32>,
    return
  }
  func.func @transform_0(%arg0: i32) -> (i32, i32) {
    %c0_i32 = arith.constant 0 : i32
    %c0_i32_0 = arith.constant 0 : i32
    %c0_i32_1 = arith.constant 0 : i32
    return %c0_i32, %c0_i32_0 : i32, i32
  }
  func.func @transform_1(%arg0: i32) -> (i32, i32) {
    %c0_i32 = arith.constant 0 : i32
    %c0_i32_0 = arith.constant 0 : i32
    %c0_i32_1 = arith.constant 0 : i32
    return %c0_i32, %c0_i32_0 : i32, i32
  }
  func.func @transform_2(%arg0: i32) -> (i32, i32) {
    %c0_i32 = arith.constant 0 : i32
    %c0_i32_0 = arith.constant 0 : i32
    %c0_i32_1 = arith.constant 0 : i32
    return %c0_i32, %c0_i32_0 : i32, i32
  }
  func.func @transform_3(%arg0: i32) -> (i32, i32) {
    %c0_i32 = arith.constant 0 : i32
    %c0_i32_0 = arith.constant 0 : i32
    %c0_i32_1 = arith.constant 0 : i32
    return %c0_i32, %c0_i32_0 : i32, i32
  }
  func.func @transform_4(%arg0: i32) -> (i32, i32) {
    %c0_i32 = arith.constant 0 : i32
    %c0_i32_0 = arith.constant 0 : i32
    %c0_i32_1 = arith.constant 0 : i32
    return %c0_i32, %c0_i32_0 : i32, i32
  }
  func.func @transform_5(%arg0: i32) -> (i32, i32) {
    %c0_i32 = arith.constant 0 : i32
    %c0_i32_0 = arith.constant 0 : i32
    %c0_i32_1 = arith.constant 0 : i32
    return %c0_i32, %c0_i32_0 : i32, i32
  }
  func.func @transform_6(%arg0: i32) -> (i32, i32) {
    %c0_i32 = arith.constant 0 : i32
    %c0_i32_0 = arith.constant 0 : i32
    %c0_i32_1 = arith.constant 0 : i32
    return %c0_i32, %c0_i32_0 : i32, i32
  }
  func.func @transform_7(%arg0: i32) -> (i32, i32) {
    %c0_i32 = arith.constant 0 : i32
    %c0_i32_0 = arith.constant 0 : i32
    %c0_i32_1 = arith.constant 0 : i32
    return %c0_i32, %c0_i32_0 : i32, i32
  }
  func.func @transform_8(%arg0: i32) -> (i32, i32) {
    %c0_i32 = arith.constant 0 : i32
    %c0_i32_0 = arith.constant 0 : i32
    %c0_i32_1 = arith.constant 0 : i32
    return %c0_i32, %c0_i32_0 : i32, i32
  }
  func.func @transform_9(%arg0: i32) -> (i32, i32) {
    %c0_i32 = arith.constant 0 : i32
    %c0_i32_0 = arith.constant 0 : i32
    %c0_i32_1 = arith.constant 0 : i32
    return %c0_i32, %c0_i32_0 : i32, i32
  }
  func.func @transform_10(%arg0: i32) -> (i32, i32) {
    %c0_i32 = arith.constant 0 : i32
    %c0_i32_0 = arith.constant 0 : i32
    %c0_i32_1 = arith.constant 0 : i32
    return %c0_i32, %c0_i32_0 : i32, i32
  }
  func.func @transform_11(%arg0: i32) -> (i32, i32) {
    %c0_i32 = arith.constant 0 : i32
    %c0_i32_0 = arith.constant 0 : i32
    %c0_i32_1 = arith.constant 0 : i32
    return %c0_i32, %c0_i32_0 : i32, i32
  }
  func.func @transform_12(%arg0: i32) -> (i32, i32) {
    %c0_i32 = arith.constant 0 : i32
    %c0_i32_0 = arith.constant 0 : i32
    %c0_i32_1 = arith.constant 0 : i32
    return %c0_i32, %c0_i32_0 : i32, i32
  }
  func.func @transform_13(%arg0: i32) -> (i32, i32) {
    %c0_i32 = arith.constant 0 : i32
    %c0_i32_0 = arith.constant 0 : i32
    %c0_i32_1 = arith.constant 0 : i32
    return %c0_i32, %c0_i32_0 : i32, i32
  }
  func.func @transform_14(%arg0: i32) -> (i32, i32) {
    %c0_i32 = arith.constant 0 : i32
    %c0_i32_0 = arith.constant 0 : i32
    %c0_i32_1 = arith.constant 0 : i32
    return %c0_i32, %c0_i32_0 : i32, i32
  }
  func.func @transform_15(%arg0: i32) -> (i32, i32) {
    %c0_i32 = arith.constant 0 : i32
    %c0_i32_0 = arith.constant 0 : i32
    %c0_i32_1 = arith.constant 0 : i32
    return %c0_i32, %c0_i32_0 : i32, i32
  }
  func.func @transform_16(%arg0: i32) -> (i32, i32) {
    %c0_i32 = arith.constant 0 : i32
    %c0_i32_0 = arith.constant 0 : i32
    %c0_i32_1 = arith.constant 0 : i32
    return %c0_i32, %c0_i32_0 : i32, i32
  }
  func.func @transform_17(%arg0: i32) -> (i32, i32) {
    %c0_i32 = arith.constant 0 : i32
    %c0_i32_0 = arith.constant 0 : i32
    %c0_i32_1 = arith.constant 0 : i32
    return %c0_i32, %c0_i32_0 : i32, i32
  }
}

</mosaic_0001>

<llo_original>
// kernel: custom-call
$region0: #{custom-call}
  %s0 = inlined_call_operand.hbm [shape: c64[2,16,16], index: 0, kind: input, shape index: {}]
  %s1 = inlined_call_operand.vmem [shape: f32[2,16,16], index: 1, kind: output, shape index: {}]
  $region1: #{custom-call} parent=0
    #allocation0 [shape = 's32[1]{0}', space=sflag, size = 0x4, scoped, tag = 'scoped memory for custom-call']
    %2 = vsyncpa [#allocation0], 0
    %s4 = sshll.u32 %s0, 4
    %s5 = int_to_ptr.hbm [resolvable:$true] %s4
    %s6 = sshll.u32 %s1, 4
    %s7 = int_to_ptr.vmem [resolvable:$true] %s6
    %9 = dma.hbm_to_vmem [thread:$0]  %s5, 512, %s7, [#allocation0]
    %11 = dma.done [#allocation0], 512
    %12 = vsyncpa [#allocation0], 1

// kernel: custom-call.1
$region0: #{custom-call.1}
  %s0 = inlined_call_operand.hbm [shape: c64[2,16,16], index: 0, kind: input, shape index: {}]
  %s1 = inlined_call_operand.vmem [shape: f32[2,16,16], index: 1, kind: output, shape index: {}]
  %s2 = scalar_lea.hbm %s0, 32
  $region1: #{custom-call.1} parent=0
    #allocation0 [shape = 's32[1]{0}', space=sflag, size = 0x4, scoped, tag = 'scoped memory for custom-call.1']
    %3 = vsyncpa [#allocation0], 0
    %s5 = sshll.u32 %s2, 4
    %s6 = int_to_ptr.hbm [resolvable:$true] %s5
    %s7 = sshll.u32 %s1, 4
    %s8 = int_to_ptr.vmem [resolvable:$true] %s7
    %10 = dma.hbm_to_vmem [thread:$0]  %s6, 512, %s8, [#allocation0]
    %12 = dma.done [#allocation0], 512
    %13 = vsyncpa [#allocation0], 1

// kernel: custom-call.2
$region0: #{custom-call.2}
  %s0 = inlined_call_operand.vmem [shape: f32[2,16,16], index: 0, kind: input, shape index: {}]
  %s1 = inlined_call_operand.vmem [shape: f32[2,16,16], index: 1, kind: input, shape index: {}]
  %s2 = inlined_call_operand.hbm [shape: c64[2,16,16], index: 2, kind: output, shape index: {}]
  %s3 = scalar_lea.hbm %s2, 32
  $region1: #{custom-call.2} parent=0
    #allocation0 [shape = 's32[1]{0}', space=sflag, size = 0x4, scoped, tag = 'scoped memory for custom-call.2']
    %4 = vsyncpa [#allocation0], 0
    %s6 = sshll.u32 %s0, 4
    %s7 = int_to_ptr.vmem [resolvable:$true] %s6
    %s8 = sshll.u32 %s2, 4
    %s9 = int_to_ptr.hbm [resolvable:$true] %s8
    %11 = dma.vmem_to_hbm [thread:$0]  %s7, 512, %s9, [#allocation0]
    %13 = dma.done [#allocation0], 512
    %14 = vsyncpa [#allocation0], 1
  $region2: #{custom-call.2} parent=0
    #allocation1 [shape = 's32[1]{0}', space=sflag, size = 0x4, scoped, tag = 'scoped memory for custom-call.2']
    %15 = vsyncpa [#allocation1], 0
    %s17 = sshll.u32 %s1, 4
    %s18 = int_to_ptr.vmem [resolvable:$true] %s17
    %s19 = sshll.u32 %s3, 4
    %s20 = int_to_ptr.hbm [resolvable:$true] %s19
    %22 = dma.vmem_to_hbm [thread:$0]  %s18, 512, %s20, [#allocation1]
    %24 = dma.done [#allocation1], 512
    %25 = vsyncpa [#allocation1], 1

// kernel: image_update_bls.1
$region0: #{image_update_bls.1}
  #allocation0 [shape = 'u32[]', space=smem, size = 0x4, offset = 0x4, fixed_abs, tag = 'smem constant byte address 0x4 - core index']
  #allocation1 [shape = 'u32[72,128]{1,0:T(1,128)}', space=vmem, size = 0x9000, scoped, tag = 'internal scratch']
  %s0 = inlined_call_operand.vmem [shape: f32[32,32], index: 0, kind: input, shape index: {}]
  %s1 = inlined_call_operand.vmem [shape: f32[32,128], index: 1, kind: input, shape index: {}]
  %s2 = inlined_call_operand.vmem [shape: f32[32,128], index: 2, kind: input, shape index: {}]
  %s3 = inlined_call_operand.vmem [shape: f32[32,128], index: 3, kind: input, shape index: {}]
  %s4 = inlined_call_operand.vmem [shape: f32[32,128], index: 4, kind: input, shape index: {}]
  %s5 = inlined_call_operand.vmem [shape: f32[32,32], index: 5, kind: input, shape index: {}]
  %s6 = inlined_call_operand.vmem [shape: f32[32,32], index: 6, kind: input, shape index: {}]
  %s7 = inlined_call_operand.vmem [shape: f32[128,128], index: 7, kind: input, shape index: {}]
  %s8 = inlined_call_operand.vmem [shape: f32[128,128], index: 8, kind: input, shape index: {}]
  %s9 = inlined_call_operand.vmem [shape: f32[256,32], index: 9, kind: input, shape index: {}]
  %s10 = inlined_call_operand.vmem [shape: f32[96,128], index: 10, kind: input, shape index: {}]
  %s11 = inlined_call_operand.vmem [shape: f32[32,128], index: 11, kind: input, shape index: {}]
  %s12 = inlined_call_operand.vmem [shape: f32[384,32], index: 12, kind: input, shape index: {}]
  %s13 = inlined_call_operand.vmem [shape: f32[32,32], index: 13, kind: input, shape index: {}]
  %s14 = inlined_call_operand.vmem [shape: f32[96,128], index: 14, kind: input, shape index: {}]
  %s15 = inlined_call_operand.vmem [shape: f32[384,32], index: 15, kind: input, shape index: {}]
  %s16 = inlined_call_operand.vmem [shape: f32[32,32], index: 16, kind: output, shape index: {0}]
  %s17 = inlined_call_operand.vmem [shape: f32[1,128], index: 17, kind: output, shape index: {1}]
  %18 = xla_tuple %s16, %s17
  %s19 = sld [smem:[#allocation0]]
  $region82: #{image_update_bls.1} parent=0
    _
  %s21 = ssub.s32 1, %s19
  %s22 = scalar_select 0, %s21, %s19
  // Predicated region
  $region2: #{image_update_bls.1} parent=0 // pred_check
    _
  $region3: #{image_update_bls.1} parent=0 // pred_check_branch
    %24 = sbr.rel (0) target = $region5
  $region4: #{image_update_bls.1} parent=0 // pred_region
    _
  $region5: #{image_update_bls.1} parent=0 // pred_fallthru
    _
  // Predicated region
  $region6: #{image_update_bls.1} parent=0 // pred_check
    _
  $region7: #{image_update_bls.1} parent=0 // pred_check_branch
    %26 = sbr.rel (0) target = $region9
  $region8: #{image_update_bls.1} parent=0 // pred_region
    _
  $region9: #{image_update_bls.1} parent=0 // pred_fallthru
    _
  // Predicated region
  $region10: #{image_update_bls.1} parent=0 // pred_check
    _
  $region11: #{image_update_bls.1} parent=0 // pred_check_branch
    %28 = sbr.rel (0) target = $region13
  $region12: #{image_update_bls.1} parent=0 // pred_region
    _
  $region13: #{image_update_bls.1} parent=0 // pred_fallthru
    _
  // Predicated region
  $region14: #{image_update_bls.1} parent=0 // pred_check
    _
  $region15: #{image_update_bls.1} parent=0 // pred_check_branch
    %30 = sbr.rel (0) target = $region17
  $region16: #{image_update_bls.1} parent=0 // pred_region
    _
  $region17: #{image_update_bls.1} parent=0 // pred_fallthru
    _
  // Predicated region
  $region18: #{image_update_bls.1} parent=0 // pred_check
    _
  $region19: #{image_update_bls.1} parent=0 // pred_check_branch
    %32 = sbr.rel (0) target = $region21
  $region20: #{image_update_bls.1} parent=0 // pred_region
    _
  $region21: #{image_update_bls.1} parent=0 // pred_fallthru
    _
  // Predicated region
  $region22: #{image_update_bls.1} parent=0 // pred_check
    _
  $region23: #{image_update_bls.1} parent=0 // pred_check_branch
    %34 = sbr.rel (0) target = $region25
  $region24: #{image_update_bls.1} parent=0 // pred_region
    _
  $region25: #{image_update_bls.1} parent=0 // pred_fallthru
    _
  // Predicated region
  $region26: #{image_update_bls.1} parent=0 // pred_check
    _
  $region27: #{image_update_bls.1} parent=0 // pred_check_branch
    %36 = sbr.rel (0) target = $region29
  $region28: #{image_update_bls.1} parent=0 // pred_region
    _
  $region29: #{image_update_bls.1} parent=0 // pred_fallthru
    _
  // Predicated region
  $region30: #{image_update_bls.1} parent=0 // pred_check
    _
  $region31: #{image_update_bls.1} parent=0 // pred_check_branch
    %38 = sbr.rel (0) target = $region33
  $region32: #{image_update_bls.1} parent=0 // pred_region
    _
  $region33: #{image_update_bls.1} parent=0 // pred_fallthru
    _
  // Predicated region
  $region34: #{image_update_bls.1} parent=0 // pred_check
    _
  $region35: #{image_update_bls.1} parent=0 // pred_check_branch
    %40 = sbr.rel (0) target = $region37
  $region36: #{image_update_bls.1} parent=0 // pred_region
    _
  $region37: #{image_update_bls.1} parent=0 // pred_fallthru
    _
  // Predicated region
  $region38: #{image_update_bls.1} parent=0 // pred_check
    _
  $region39: #{image_update_bls.1} parent=0 // pred_check_branch
    %42 = sbr.rel (0) target = $region41
  $region40: #{image_update_bls.1} parent=0 // pred_region
    _
  $region41: #{image_update_bls.1} parent=0 // pred_fallthru
    _
  // Predicated region
  $region42: #{image_update_bls.1} parent=0 // pred_check
    _
  $region43: #{image_update_bls.1} parent=0 // pred_check_branch
    %44 = sbr.rel (0) target = $region45
  $region44: #{image_update_bls.1} parent=0 // pred_region
    _
  $region45: #{image_update_bls.1} parent=0 // pred_fallthru
    _
  // Predicated region
  $region46: #{image_update_bls.1} parent=0 // pred_check
    _
  $region47: #{image_update_bls.1} parent=0 // pred_check_branch
    %46 = sbr.rel (0) target = $region49
  $region48: #{image_update_bls.1} parent=0 // pred_region
    _
  $region49: #{image_update_bls.1} parent=0 // pred_fallthru
    _
  // Predicated region
  $region50: #{image_update_bls.1} parent=0 // pred_check
    _
  $region51: #{image_update_bls.1} parent=0 // pred_check_branch
    %48 = sbr.rel (0) target = $region53
  $region52: #{image_update_bls.1} parent=0 // pred_region
    _
  $region53: #{image_update_bls.1} parent=0 // pred_fallthru
    _
  // Predicated region
  $region54: #{image_update_bls.1} parent=0 // pred_check
    _
  $region55: #{image_update_bls.1} parent=0 // pred_check_branch
    %50 = sbr.rel (0) target = $region57
  $region56: #{image_update_bls.1} parent=0 // pred_region
    _
  $region57: #{image_update_bls.1} parent=0 // pred_fallthru
    _
  // Predicated region
  $region58: #{image_update_bls.1} parent=0 // pred_check
    _
  $region59: #{image_update_bls.1} parent=0 // pred_check_branch
    %52 = sbr.rel (0) target = $region61
  $region60: #{image_update_bls.1} parent=0 // pred_region
    _
  $region61: #{image_update_bls.1} parent=0 // pred_fallthru
    _
  // Predicated region
  $region62: #{image_update_bls.1} parent=0 // pred_check
    _
  $region63: #{image_update_bls.1} parent=0 // pred_check_branch
    %54 = sbr.rel (0) target = $region65
  $region64: #{image_update_bls.1} parent=0 // pred_region
    _
  $region65: #{image_update_bls.1} parent=0 // pred_fallthru
    _
  %v55 = vld [vmem:[%s0] sm:$0xff]
  %v56 = vld [vmem:[%s0 + $0x8] sm:$0xff]
  %v57 = vld [vmem:[%s0 + $0x10] sm:$0xff]
  %v58 = vld [vmem:[%s0 + $0x18] sm:$0xff]
  %v59 = vld [vmem:[%s1] sm:$0xff]
  %v60 = vld [vmem:[%s1 + $0x8] sm:$0xff]
  %v61 = vld [vmem:[%s1 + $0x10] sm:$0xff]
  %v62 = vld [vmem:[%s1 + $0x18] sm:$0xff]
  %v63 = vld [vmem:[%s2] sm:$0xff]
  %v64 = vld [vmem:[%s2 + $0x8] sm:$0xff]
  %v65 = vld [vmem:[%s2 + $0x10] sm:$0xff]
  %v66 = vld [vmem:[%s2 + $0x18] sm:$0xff]
  %v67 = vld [vmem:[%s3] sm:$0xff]
  %v68 = vld [vmem:[%s3 + $0x8] sm:$0xff]
  %v69 = vld [vmem:[%s3 + $0x10] sm:$0xff]
  %v70 = vld [vmem:[%s3 + $0x18] sm:$0xff]
  %75 = vrot.lane.b32.xlu0 %v55, 16
  %v76 = vpop.permute.xlu0 %75
  %77 = vrot.lane.b32.xlu0 %v56, 16
  %v78 = vpop.permute.xlu0 %77
  %79 = vrot.lane.b32.xlu0 %v57, 16
  %v80 = vpop.permute.xlu0 %79
  %81 = vrot.lane.b32.xlu0 %v58, 16
  %v82 = vpop.permute.xlu0 %81
  %87 = vrot.lane.b32.xlu0 %v55, 32
  %v88 = vpop.permute.xlu0 %87
  %89 = vrot.lane.b32.xlu0 %v56, 32
  %v90 = vpop.permute.xlu0 %89
  %91 = vrot.lane.b32.xlu0 %v57, 32
  %v92 = vpop.permute.xlu0 %91
  %93 = vrot.lane.b32.xlu0 %v58, 32
  %v94 = vpop.permute.xlu0 %93
  %99 = vrot.lane.b32.xlu0 %v55, 48
  %v100 = vpop.permute.xlu0 %99
  %101 = vrot.lane.b32.xlu0 %v56, 48
  %v102 = vpop.permute.xlu0 %101
  %103 = vrot.lane.b32.xlu0 %v57, 48
  %v104 = vpop.permute.xlu0 %103
  %105 = vrot.lane.b32.xlu0 %v58, 48
  %v106 = vpop.permute.xlu0 %105
  %111 = vrot.lane.b32.xlu0 %v55, 64
  %v112 = vpop.permute.xlu0 %111
  %113 = vrot.lane.b32.xlu0 %v56, 64
  %v114 = vpop.permute.xlu0 %113
  %115 = vrot.lane.b32.xlu0 %v57, 64
  %v116 = vpop.permute.xlu0 %115
  %117 = vrot.lane.b32.xlu0 %v58, 64
  %v118 = vpop.permute.xlu0 %117
  %123 = vrot.lane.b32.xlu0 %v55, 80
  %v124 = vpop.permute.xlu0 %123
  %125 = vrot.lane.b32.xlu0 %v56, 80
  %v126 = vpop.permute.xlu0 %125
  %127 = vrot.lane.b32.xlu0 %v57, 80
  %v128 = vpop.permute.xlu0 %127
  %129 = vrot.lane.b32.xlu0 %v58, 80
  %v130 = vpop.permute.xlu0 %129
  %135 = vrot.lane.b32.xlu0 %v55, 96
  %v136 = vpop.permute.xlu0 %135
  %137 = vrot.lane.b32.xlu0 %v56, 96
  %v138 = vpop.permute.xlu0 %137
  %139 = vrot.lane.b32.xlu0 %v57, 96
  %v140 = vpop.permute.xlu0 %139
  %141 = vrot.lane.b32.xlu0 %v58, 96
  %v142 = vpop.permute.xlu0 %141
  %147 = vrot.lane.b32.xlu0 %v55, 112
  %v148 = vpop.permute.xlu0 %147
  %149 = vrot.lane.b32.xlu0 %v56, 112
  %v150 = vpop.permute.xlu0 %149
  %151 = vrot.lane.b32.xlu0 %v57, 112
  %v152 = vpop.permute.xlu0 %151
  %153 = vrot.lane.b32.xlu0 %v58, 112
  %v154 = vpop.permute.xlu0 %153
  %vm159 = vcmask 130048
  %v160 = vsel %vm159, %v55, %v76
  %v161 = vsel %vm159, %v56, %v78
  %v162 = vsel %vm159, %v57, %v80
  %v163 = vsel %vm159, %v58, %v82
  %vm164 = vcmask 261120
  %v165 = vsel %vm164, %v160, %v88
  %v166 = vsel %vm164, %v161, %v90
  %v167 = vsel %vm164, %v162, %v92
  %v168 = vsel %vm164, %v163, %v94
  %vm169 = vcmask 392192
  %v170 = vsel %vm169, %v165, %v100
  %v171 = vsel %vm169, %v166, %v102
  %v172 = vsel %vm169, %v167, %v104
  %v173 = vsel %vm169, %v168, %v106
  %vm174 = vcmask 523264
  %v175 = vsel %vm174, %v170, %v112
  %v176 = vsel %vm174, %v171, %v114
  %v177 = vsel %vm174, %v172, %v116
  %v178 = vsel %vm174, %v173, %v118
  %vm179 = vcmask 654336
  %v180 = vsel %vm179, %v175, %v124
  %v181 = vsel %vm179, %v176, %v126
  %v182 = vsel %vm179, %v177, %v128
  %v183 = vsel %vm179, %v178, %v130
  %vm184 = vcmask 785408
  %v185 = vsel %vm184, %v180, %v136
  %v186 = vsel %vm184, %v181, %v138
  %v187 = vsel %vm184, %v182, %v140
  %v188 = vsel %vm184, %v183, %v142
  %vm189 = vcmask 916480
  %v190 = vsel %vm189, %v185, %v148
  %v191 = vsel %vm189, %v186, %v150
  %v192 = vsel %vm189, %v187, %v152
  %v193 = vsel %vm189, %v188, %v154
  %v194 = vsel %vm159, %v148, %v55
  %v195 = vsel %vm159, %v150, %v56
  %v196 = vsel %vm159, %v152, %v57
  %v197 = vsel %vm159, %v154, %v58
  %v198 = vsel %vm164, %v194, %v76
  %v199 = vsel %vm164, %v195, %v78
  %v200 = vsel %vm164, %v196, %v80
  %v201 = vsel %vm164, %v197, %v82
  %v202 = vsel %vm169, %v198, %v88
  %v203 = vsel %vm169, %v199, %v90
  %v204 = vsel %vm169, %v200, %v92
  %v205 = vsel %vm169, %v201, %v94
  %v206 = vsel %vm174, %v202, %v100
  %v207 = vsel %vm174, %v203, %v102
  %v208 = vsel %vm174, %v204, %v104
  %v209 = vsel %vm174, %v205, %v106
  %v210 = vsel %vm179, %v206, %v112
  %v211 = vsel %vm179, %v207, %v114
  %v212 = vsel %vm179, %v208, %v116
  %v213 = vsel %vm179, %v209, %v118
  %v214 = vsel %vm184, %v210, %v124
  %v215 = vsel %vm184, %v211, %v126
  %v216 = vsel %vm184, %v212, %v128
  %v217 = vsel %vm184, %v213, %v130
  %v218 = vsel %vm189, %v214, %v136
  %v219 = vsel %vm189, %v215, %v138
  %v220 = vsel %vm189, %v216, %v140
  %v221 = vsel %vm189, %v217, %v142
  %v222 = vmul.f32 %v190, %v59
  %v223 = vmul.f32 %v191, %v60
  %v224 = vmul.f32 %v192, %v61
  %v225 = vmul.f32 %v193, %v62
  %v226 = vmul.f32 %v218, %v63
  %v227 = vmul.f32 %v219, %v64
  %v228 = vmul.f32 %v220, %v65
  %v229 = vmul.f32 %v221, %v66
  %v230 = vadd.f32 %v222, %v226
  %v231 = vadd.f32 %v223, %v227
  %v232 = vadd.f32 %v224, %v228
  %v233 = vadd.f32 %v225, %v229
  %v234 = vlaneseq
  %v235 = vand.u32 %v234, 127
  %vm236 = vcmp.lt.s32.totalorder %v235, 64
  %v237 = vsel %vm236, -1.0, 1.0
  %v238 = vld [vmem:[%s5] sm:$0xff]
  %v239 = vld [vmem:[%s5 + $0x8] sm:$0xff]
  %v240 = vld [vmem:[%s5 + $0x10] sm:$0xff]
  %v241 = vld [vmem:[%s5 + $0x18] sm:$0xff]
  %v242 = vld [vmem:[%s6] sm:$0xff]
  %v243 = vld [vmem:[%s6 + $0x8] sm:$0xff]
  %v244 = vld [vmem:[%s6 + $0x10] sm:$0xff]
  %v245 = vld [vmem:[%s6 + $0x18] sm:$0xff]
  %246 = vrot.lane.b32.xlu0 %v230, 64
  %v247 = vpop.permute.xlu0 %246
  %248 = vrot.lane.b32.xlu0 %v231, 64
  %v249 = vpop.permute.xlu0 %248
  %250 = vrot.lane.b32.xlu0 %v232, 64
  %v251 = vpop.permute.xlu0 %250
  %252 = vrot.lane.b32.xlu0 %v233, 64
  %v253 = vpop.permute.xlu0 %252
  %v254 = vmul.f32 %v247, %v237
  %v255 = vmul.f32 %v249, %v237
  %v256 = vmul.f32 %v251, %v237
  %v257 = vmul.f32 %v253, %v237
  %v259 = vsel %vm164, %v242, 0
  %v262 = vsel %vm164, %v243, 0
  %v265 = vsel %vm164, %v244, 0
  %v268 = vsel %vm164, %v245, 0
  %270 = vmatpush.msra.mxu0 0.0
  %271 = vmatpush.msra.mxu0 0.0
  %272 = vmatpush.msra.mxu0 0.0
  %273 = vmatpush.msra.mxu0 0.0
  %274 = vmatpush.msra.mxu0 0.0
  %275 = vmatpush.msra.mxu0 0.0
  %276 = vmatpush.msra.mxu0 0.0
  %277 = vmatpush.msra.mxu0 0.0
  %278 = vmatpush.msra.mxu0 0.0
  %279 = vmatpush.msra.mxu0 0.0
  %280 = vmatpush.msra.mxu0 0.0
  %281 = vmatpush.msra.mxu0 0.0
  %282 = vmatpush.msra.mxu0 %v257
  %283 = vmatpush.msra.mxu0 %v256
  %284 = vmatpush.msra.mxu0 %v255
  %285 = vmatpush.msra.mxu0 %v254
  %286 = vmatmul.f32.gmra.mxu0 %v259
  %v287 = vpop.f32.mrf.mxu0
  %v288 = vadd.f32 0.0, %v287
  %289 = vmatmul.f32.gmra.mxu0 %v262
  %v290 = vpop.f32.mrf.mxu0
  %v291 = vadd.f32 0.0, %v290
  %292 = vmatmul.f32.gmra.mxu0 %v265
  %v293 = vpop.f32.mrf.mxu0
  %v294 = vadd.f32 0.0, %v293
  %295 = vmatmul.f32.gmra.mxu0 %v268
  %v296 = vpop.f32.mrf.mxu0
  %v297 = vadd.f32 0.0, %v296
  %298 = vdwg.mxu0
  %v300 = vsel %vm164, %v238, 0
  %v303 = vsel %vm164, %v239, 0
  %v306 = vsel %vm164, %v240, 0
  %v309 = vsel %vm164, %v241, 0
  %311 = vmatpush.msra.mxu0 0.0
  %312 = vmatpush.msra.mxu0 0.0
  %313 = vmatpush.msra.mxu0 0.0
  %314 = vmatpush.msra.mxu0 0.0
  %315 = vmatpush.msra.mxu0 0.0
  %316 = vmatpush.msra.mxu0 0.0
  %317 = vmatpush.msra.mxu0 0.0
  %318 = vmatpush.msra.mxu0 0.0
  %319 = vmatpush.msra.mxu0 0.0
  %320 = vmatpush.msra.mxu0 0.0
  %321 = vmatpush.msra.mxu0 0.0
  %322 = vmatpush.msra.mxu0 0.0
  %323 = vmatpush.msra.mxu0 %v233
  %324 = vmatpush.msra.mxu0 %v232
  %325 = vmatpush.msra.mxu0 %v231
  %326 = vmatpush.msra.mxu0 %v230
  %327 = vmatmul.f32.gmra.mxu0 %v300
  %v328 = vpop.f32.mrf.mxu0
  %v329 = vadd.f32 %v288, %v328
  %330 = vmatmul.f32.gmra.mxu0 %v303
  %v331 = vpop.f32.mrf.mxu0
  %v332 = vadd.f32 %v291, %v331
  %333 = vmatmul.f32.gmra.mxu0 %v306
  %v334 = vpop.f32.mrf.mxu0
  %v335 = vadd.f32 %v294, %v334
  %336 = vmatmul.f32.gmra.mxu0 %v309
  %v337 = vpop.f32.mrf.mxu0
  %v338 = vadd.f32 %v297, %v337
  %339 = vdwg.mxu0
  %v340 = vld [vmem:[%s7] sm:$0xff]
  %v341 = vld [vmem:[%s7 + $0x8] sm:$0xff]
  %v342 = vld [vmem:[%s7 + $0x10] sm:$0xff]
  %v343 = vld [vmem:[%s7 + $0x18] sm:$0xff]
  %v344 = vld [vmem:[%s7 + $0x20] sm:$0xff]
  %v345 = vld [vmem:[%s7 + $0x28] sm:$0xff]
  %v346 = vld [vmem:[%s7 + $0x30] sm:$0xff]
  %v347 = vld [vmem:[%s7 + $0x38] sm:$0xff]
  %v348 = vld [vmem:[%s7 + $0x40] sm:$0xff]
  %v349 = vld [vmem:[%s7 + $0x48] sm:$0xff]
  %v350 = vld [vmem:[%s7 + $0x50] sm:$0xff]
  %v351 = vld [vmem:[%s7 + $0x58] sm:$0xff]
  %v352 = vld [vmem:[%s7 + $0x60] sm:$0xff]
  %v353 = vld [vmem:[%s7 + $0x68] sm:$0xff]
  %v354 = vld [vmem:[%s7 + $0x70] sm:$0xff]
  %v355 = vld [vmem:[%s7 + $0x78] sm:$0xff]
  %356 = vmatpush.msra.mxu0 %v355
  %357 = vmatpush.msra.mxu0 %v354
  %358 = vmatpush.msra.mxu0 %v353
  %359 = vmatpush.msra.mxu0 %v352
  %360 = vmatpush.msra.mxu0 %v351
  %361 = vmatpush.msra.mxu0 %v350
  %362 = vmatpush.msra.mxu0 %v349
  %363 = vmatpush.msra.mxu0 %v348
  %364 = vmatpush.msra.mxu0 %v347
  %365 = vmatpush.msra.mxu0 %v346
  %366 = vmatpush.msra.mxu0 %v345
  %367 = vmatpush.msra.mxu0 %v344
  %368 = vmatpush.msra.mxu0 %v343
  %369 = vmatpush.msra.mxu0 %v342
  %370 = vmatpush.msra.mxu0 %v341
  %371 = vmatpush.msra.mxu0 %v340
  %372 = vmatmul.f32.gmra.mxu0 %v329
  %v373 = vpop.f32.mrf.mxu0
  %v374 = vadd.f32 0.0, %v373
  %375 = vmatmul.f32.gmra.mxu0 %v332
  %v376 = vpop.f32.mrf.mxu0
  %v377 = vadd.f32 0.0, %v376
  %378 = vmatmul.f32.gmra.mxu0 %v335
  %v379 = vpop.f32.mrf.mxu0
  %v380 = vadd.f32 0.0, %v379
  %381 = vmatmul.f32.gmra.mxu0 %v338
  %v382 = vpop.f32.mrf.mxu0
  %v383 = vadd.f32 0.0, %v382
  %384 = vdwg.mxu0
  %v385 = vmul.f32 %v374, %v67
  %v386 = vmul.f32 %v377, %v68
  %v387 = vmul.f32 %v380, %v69
  %v388 = vmul.f32 %v383, %v70
  %v389 = vld [vmem:[%s4] sm:$0xff]
  %v390 = vld [vmem:[%s4 + $0x8] sm:$0xff]
  %v391 = vld [vmem:[%s4 + $0x10] sm:$0xff]
  %v392 = vld [vmem:[%s4 + $0x18] sm:$0xff]
  %v393 = vsub.f32 %v385, %v389
  %v394 = vsub.f32 %v386, %v390
  %v395 = vsub.f32 %v387, %v391
  %v396 = vsub.f32 %v388, %v392
  %v397 = vmul.f32 %v393, %v393
  %v398 = vmul.f32 %v394, %v394
  %v399 = vmul.f32 %v395, %v395
  %v400 = vmul.f32 %v396, %v396
  %v401 = vadd.f32 %v397, %v398
  %v402 = vadd.f32 %v401, %v399
  %v403 = vadd.f32 %v402, %v400
  %404 = vadd.xlane.f32.xlu0 %v403
  %v405 = vpop.xlane.xlu0 %404
  %v406 = vrot.slane %v405, 4
  %v407 = vadd.f32 %v405, %v406
  %v408 = vrot.slane %v407, 2
  %v409 = vadd.f32 %v407, %v408
  %v410 = vrot.slane %v409, 1
  %v411 = vadd.f32 %v409, %v410
  %s412 = vtos %v411
  %s413 = smul.f32 %s412, 0.5
  %v414 = vmul.f32 %v393, %v67
  %v415 = vmul.f32 %v394, %v68
  %v416 = vmul.f32 %v395, %v69
  %v417 = vmul.f32 %v396, %v70
  %418 = vmatpush.msra.mxu0 0.0
  %419 = vmatpush.msra.mxu0 0.0
  %420 = vmatpush.msra.mxu0 0.0
  %421 = vmatpush.msra.mxu0 0.0
  %422 = vmatpush.msra.mxu0 0.0
  %423 = vmatpush.msra.mxu0 0.0
  %424 = vmatpush.msra.mxu0 0.0
  %425 = vmatpush.msra.mxu0 0.0
  %426 = vmatpush.msra.mxu0 0.0
  %427 = vmatpush.msra.mxu0 0.0
  %428 = vmatpush.msra.mxu0 0.0
  %429 = vmatpush.msra.mxu0 0.0
  %430 = vmatpush.msra.mxu0 %v417
  %431 = vmatpush.msra.mxu0 %v416
  %432 = vmatpush.msra.mxu0 %v415
  %433 = vmatpush.msra.mxu0 %v414
  %434 = vmatmul.f32.gmra.mxu0 %v300
  %v435 = vpop.f32.mrf.mxu0
  %v436 = vadd.f32 0.0, %v435
  %437 = vmatmul.f32.gmra.mxu0 %v303
  %v438 = vpop.f32.mrf.mxu0
  %v439 = vadd.f32 0.0, %v438
  %440 = vmatmul.f32.gmra.mxu0 %v306
  %v441 = vpop.f32.mrf.mxu0
  %v442 = vadd.f32 0.0, %v441
  %443 = vmatmul.f32.gmra.mxu0 %v309
  %v444 = vpop.f32.mrf.mxu0
  %v445 = vadd.f32 0.0, %v444
  %446 = vdwg.mxu0
  %447 = vrot.lane.b32.xlu0 %v414, 64
  %v448 = vpop.permute.xlu0 %447
  %449 = vrot.lane.b32.xlu0 %v415, 64
  %v450 = vpop.permute.xlu0 %449
  %451 = vrot.lane.b32.xlu0 %v416, 64
  %v452 = vpop.permute.xlu0 %451
  %453 = vrot.lane.b32.xlu0 %v417, 64
  %v454 = vpop.permute.xlu0 %453
  %v455 = vmul.f32 %v448, %v237
  %v456 = vmul.f32 %v450, %v237
  %v457 = vmul.f32 %v452, %v237
  %v458 = vmul.f32 %v454, %v237
  %459 = vmatpush.msra.mxu0 0.0
  %460 = vmatpush.msra.mxu0 0.0
  %461 = vmatpush.msra.mxu0 0.0
  %462 = vmatpush.msra.mxu0 0.0
  %463 = vmatpush.msra.mxu0 0.0
  %464 = vmatpush.msra.mxu0 0.0
  %465 = vmatpush.msra.mxu0 0.0
  %466 = vmatpush.msra.mxu0 0.0
  %467 = vmatpush.msra.mxu0 0.0
  %468 = vmatpush.msra.mxu0 0.0
  %469 = vmatpush.msra.mxu0 0.0
  %470 = vmatpush.msra.mxu0 0.0
  %471 = vmatpush.msra.mxu0 %v458
  %472 = vmatpush.msra.mxu0 %v457
  %473 = vmatpush.msra.mxu0 %v456
  %474 = vmatpush.msra.mxu0 %v455
  %475 = vmatmul.f32.gmra.mxu0 %v259
  %v476 = vpop.f32.mrf.mxu0
  %v477 = vadd.f32 0.0, %v476
  %478 = vmatmul.f32.gmra.mxu0 %v262
  %v479 = vpop.f32.mrf.mxu0
  %v480 = vadd.f32 0.0, %v479
  %481 = vmatmul.f32.gmra.mxu0 %v265
  %v482 = vpop.f32.mrf.mxu0
  %v483 = vadd.f32 0.0, %v482
  %484 = vmatmul.f32.gmra.mxu0 %v268
  %v485 = vpop.f32.mrf.mxu0
  %v486 = vadd.f32 0.0, %v485
  %487 = vdwg.mxu0
  %v488 = vsub.f32 %v436, %v477
  %v489 = vsub.f32 %v439, %v480
  %v490 = vsub.f32 %v442, %v483
  %v491 = vsub.f32 %v445, %v486
  %v492 = vld [vmem:[%s8] sm:$0xff]
  %v493 = vld [vmem:[%s8 + $0x8] sm:$0xff]
  %v494 = vld [vmem:[%s8 + $0x10] sm:$0xff]
  %v495 = vld [vmem:[%s8 + $0x18] sm:$0xff]
  %v496 = vld [vmem:[%s8 + $0x20] sm:$0xff]
  %v497 = vld [vmem:[%s8 + $0x28] sm:$0xff]
  %v498 = vld [vmem:[%s8 + $0x30] sm:$0xff]
  %v499 = vld [vmem:[%s8 + $0x38] sm:$0xff]
  %v500 = vld [vmem:[%s8 + $0x40] sm:$0xff]
  %v501 = vld [vmem:[%s8 + $0x48] sm:$0xff]
  %v502 = vld [vmem:[%s8 + $0x50] sm:$0xff]
  %v503 = vld [vmem:[%s8 + $0x58] sm:$0xff]
  %v504 = vld [vmem:[%s8 + $0x60] sm:$0xff]
  %v505 = vld [vmem:[%s8 + $0x68] sm:$0xff]
  %v506 = vld [vmem:[%s8 + $0x70] sm:$0xff]
  %v507 = vld [vmem:[%s8 + $0x78] sm:$0xff]
  %508 = vmatpush.msra.mxu0 %v507
  %509 = vmatpush.msra.mxu0 %v506
  %510 = vmatpush.msra.mxu0 %v505
  %511 = vmatpush.msra.mxu0 %v504
  %512 = vmatpush.msra.mxu0 %v503
  %513 = vmatpush.msra.mxu0 %v502
  %514 = vmatpush.msra.mxu0 %v501
  %515 = vmatpush.msra.mxu0 %v500
  %516 = vmatpush.msra.mxu0 %v499
  %517 = vmatpush.msra.mxu0 %v498
  %518 = vmatpush.msra.mxu0 %v497
  %519 = vmatpush.msra.mxu0 %v496
  %520 = vmatpush.msra.mxu0 %v495
  %521 = vmatpush.msra.mxu0 %v494
  %522 = vmatpush.msra.mxu0 %v493
  %523 = vmatpush.msra.mxu0 %v492
  %524 = vmatmul.f32.gmra.mxu0 %v488
  %v525 = vpop.f32.mrf.mxu0
  %v526 = vadd.f32 0.0, %v525
  %527 = vmatmul.f32.gmra.mxu0 %v489
  %v528 = vpop.f32.mrf.mxu0
  %v529 = vadd.f32 0.0, %v528
  %530 = vmatmul.f32.gmra.mxu0 %v490
  %v531 = vpop.f32.mrf.mxu0
  %v532 = vadd.f32 0.0, %v531
  %533 = vmatmul.f32.gmra.mxu0 %v491
  %v534 = vpop.f32.mrf.mxu0
  %v535 = vadd.f32 0.0, %v534
  %536 = vdwg.mxu0
  %v537 = vmul.f32 %v59, %v526
  %v538 = vmul.f32 %v60, %v529
  %v539 = vmul.f32 %v61, %v532
  %v540 = vmul.f32 %v62, %v535
  %v541 = vmul.f32 %v63, %v526
  %v542 = vmul.f32 %v64, %v529
  %v543 = vmul.f32 %v65, %v532
  %v544 = vmul.f32 %v66, %v535
  %v545 = vld [vmem:[%s9] sm:$0xff]
  %v546 = vld [vmem:[%s9 + $0x8] sm:$0xff]
  %v547 = vld [vmem:[%s9 + $0x10] sm:$0xff]
  %v548 = vld [vmem:[%s9 + $0x18] sm:$0xff]
  %v549 = vld [vmem:[%s9 + $0x20] sm:$0xff]
  %v550 = vld [vmem:[%s9 + $0x28] sm:$0xff]
  %v551 = vld [vmem:[%s9 + $0x30] sm:$0xff]
  %v552 = vld [vmem:[%s9 + $0x38] sm:$0xff]
  %v553 = vld [vmem:[%s9 + $0x40] sm:$0xff]
  %v554 = vld [vmem:[%s9 + $0x48] sm:$0xff]
  %v555 = vld [vmem:[%s9 + $0x50] sm:$0xff]
  %v556 = vld [vmem:[%s9 + $0x58] sm:$0xff]
  %v557 = vld [vmem:[%s9 + $0x60] sm:$0xff]
  %v558 = vld [vmem:[%s9 + $0x68] sm:$0xff]
  %v559 = vld [vmem:[%s9 + $0x70] sm:$0xff]
  %v560 = vld [vmem:[%s9 + $0x78] sm:$0xff]
  %v561 = vld [vmem:[%s9 + $0x80] sm:$0xff]
  %v562 = vld [vmem:[%s9 + $0x88] sm:$0xff]
  %v563 = vld [vmem:[%s9 + $0x90] sm:$0xff]
  %v564 = vld [vmem:[%s9 + $0x98] sm:$0xff]
  %v565 = vld [vmem:[%s9 + $0xa0] sm:$0xff]
  %v566 = vld [vmem:[%s9 + $0xa8] sm:$0xff]
  %v567 = vld [vmem:[%s9 + $0xb0] sm:$0xff]
  %v568 = vld [vmem:[%s9 + $0xb8] sm:$0xff]
  %v569 = vld [vmem:[%s9 + $0xc0] sm:$0xff]
  %v570 = vld [vmem:[%s9 + $0xc8] sm:$0xff]
  %v571 = vld [vmem:[%s9 + $0xd0] sm:$0xff]
  %v572 = vld [vmem:[%s9 + $0xd8] sm:$0xff]
  %v573 = vld [vmem:[%s9 + $0xe0] sm:$0xff]
  %v574 = vld [vmem:[%s9 + $0xe8] sm:$0xff]
  %v575 = vld [vmem:[%s9 + $0xf0] sm:$0xff]
  %v576 = vld [vmem:[%s9 + $0xf8] sm:$0xff]
  %577 = vmatpush.msra.mxu0 %v560
  %578 = vmatpush.msra.mxu0 %v559
  %579 = vmatpush.msra.mxu0 %v558
  %580 = vmatpush.msra.mxu0 %v557
  %581 = vmatpush.msra.mxu0 %v556
  %582 = vmatpush.msra.mxu0 %v555
  %583 = vmatpush.msra.mxu0 %v554
  %584 = vmatpush.msra.mxu0 %v553
  %585 = vmatpush.msra.mxu0 %v552
  %586 = vmatpush.msra.mxu0 %v551
  %587 = vmatpush.msra.mxu0 %v550
  %588 = vmatpush.msra.mxu0 %v549
  %589 = vmatpush.msra.mxu0 %v548
  %590 = vmatpush.msra.mxu0 %v547
  %591 = vmatpush.msra.mxu0 %v546
  %592 = vmatpush.msra.mxu0 %v545
  %593 = vmatmul.f32.gmra.mxu0 %v537
  %v594 = vpop.f32.mrf.mxu0
  %v595 = vadd.f32 0.0, %v594
  %596 = vmatmul.f32.gmra.mxu0 %v538
  %v597 = vpop.f32.mrf.mxu0
  %v598 = vadd.f32 0.0, %v597
  %599 = vmatmul.f32.gmra.mxu0 %v539
  %v600 = vpop.f32.mrf.mxu0
  %v601 = vadd.f32 0.0, %v600
  %602 = vmatmul.f32.gmra.mxu0 %v540
  %v603 = vpop.f32.mrf.mxu0
  %v604 = vadd.f32 0.0, %v603
  %605 = vdwg.mxu0
  %606 = vmatpush.msra.mxu0 %v576
  %607 = vmatpush.msra.mxu0 %v575
  %608 = vmatpush.msra.mxu0 %v574
  %609 = vmatpush.msra.mxu0 %v573
  %610 = vmatpush.msra.mxu0 %v572
  %611 = vmatpush.msra.mxu0 %v571
  %612 = vmatpush.msra.mxu0 %v570
  %613 = vmatpush.msra.mxu0 %v569
  %614 = vmatpush.msra.mxu0 %v568
  %615 = vmatpush.msra.mxu0 %v567
  %616 = vmatpush.msra.mxu0 %v566
  %617 = vmatpush.msra.mxu0 %v565
  %618 = vmatpush.msra.mxu0 %v564
  %619 = vmatpush.msra.mxu0 %v563
  %620 = vmatpush.msra.mxu0 %v562
  %621 = vmatpush.msra.mxu0 %v561
  %622 = vmatmul.f32.gmra.mxu0 %v541
  %v623 = vpop.f32.mrf.mxu0
  %v624 = vadd.f32 %v595, %v623
  %625 = vmatmul.f32.gmra.mxu0 %v542
  %v626 = vpop.f32.mrf.mxu0
  %v627 = vadd.f32 %v598, %v626
  %628 = vmatmul.f32.gmra.mxu0 %v543
  %v629 = vpop.f32.mrf.mxu0
  %v630 = vadd.f32 %v601, %v629
  %631 = vmatmul.f32.gmra.mxu0 %v544
  %v632 = vpop.f32.mrf.mxu0
  %v633 = vadd.f32 %v604, %v632
  %634 = vdwg.mxu0
  %v635 = vmul.f32 %v624, 2.0
  %v636 = vmul.f32 %v627, 2.0
  %v637 = vmul.f32 %v630, 2.0
  %v638 = vmul.f32 %v633, 2.0
  %v639 = vsub.f32 %v55, %v635
  %v640 = vsub.f32 %v56, %v636
  %v641 = vsub.f32 %v57, %v637
  %v642 = vsub.f32 %v58, %v638
  %v643 = vlaneseq
  %v644 = vshrl.u32 %v643, 7
  %v645 = vadd.s32 %v644, 8
  %v646 = vadd.s32 %v644, 16
  %v647 = vadd.s32 %v644, 24
  %vm648 = vcmp.lt.s32.totalorder %v644, 0
  %v649 = vsub.s32 0, %v644
  %v650 = vsel %vm648, %v649, %v644
  %v651 = vshrl.u32 %v650, 4
  %v652 = vand.u32 %v650, 15
  %v653 = vsub.s32 0, %v652
  %v654 = vsel %vm648, %v653, %v652
  %vm655 = vcmp.lt.s32.totalorder %v645, 0
  %v656 = vsub.s32 0, %v645
  %v657 = vsel %vm655, %v656, %v645
  %v658 = vshrl.u32 %v657, 4
  %v659 = vand.u32 %v657, 15
  %v660 = vsub.s32 0, %v659
  %v661 = vsel %vm655, %v660, %v659
  %vm662 = vcmp.lt.s32.totalorder %v646, 0
  %v663 = vsub.s32 0, %v646
  %v664 = vsel %vm662, %v663, %v646
  %v665 = vshrl.u32 %v664, 4
  %v666 = vand.u32 %v664, 15
  %v667 = vsub.s32 0, %v666
  %v668 = vsel %vm662, %v667, %v666
  %vm669 = vcmp.lt.s32.totalorder %v647, 0
  %v670 = vsub.s32 0, %v647
  %v671 = vsel %vm669, %v670, %v647
  %v672 = vshrl.u32 %v671, 4
  %v673 = vand.u32 %v671, 15
  %v674 = vsub.s32 0, %v673
  %v675 = vsel %vm669, %v674, %v673
  %vm676 = vcmp.ne.s32.totalorder %v654, 0
  %vm677 = vcmp.ne.s32.totalorder %v661, 0
  %vm678 = vcmp.ne.s32.totalorder %v668, 0
  %vm679 = vcmp.ne.s32.totalorder %v675, 0
  %vm680 = vcmp.lt.s32.totalorder %v654, 0
  %vm681 = vcmp.lt.s32.totalorder %v661, 0
  %vm682 = vcmp.lt.s32.totalorder %v668, 0
  %vm683 = vcmp.lt.s32.totalorder %v675, 0
  %vm684 = vmand %vm680, %vm676
  %vm685 = vmand %vm681, %vm677
  %vm686 = vmand %vm682, %vm678
  %vm687 = vmand %vm683, %vm679
  %v688 = vadd.s32 %v654, 16
  %v689 = vadd.s32 %v661, 16
  %v690 = vadd.s32 %v668, 16
  %v691 = vadd.s32 %v675, 16
  %v692 = vsel %vm684, %v688, %v654
  %v693 = vsel %vm685, %v689, %v661
  %v694 = vsel %vm686, %v690, %v668
  %v695 = vsel %vm687, %v691, %v675
  %vm696 = vcmp.eq.s32.totalorder %v692, 0
  %vm697 = vcmp.eq.s32.totalorder %v693, 0
  %vm698 = vcmp.eq.s32.totalorder %v694, 0
  %vm699 = vcmp.eq.s32.totalorder %v695, 0
  %v700 = vrot.slane %v639, 7
  %v701 = vrot.slane %v640, 7
  %v702 = vrot.slane %v641, 7
  %v703 = vrot.slane %v642, 7
  %vm704 = vcmp.lt.s32.totalorder %v644, 1
  %v705 = vsel %vm704, %v702, %v703
  %v706 = vsel %vm704, %v701, %v702
  %v707 = vsel %vm704, %v700, %v701
  %v708 = vsel %vm704, %v703, %v700
  %v709 = vsel %vm696, 0.0, %v708
  %v710 = vsel %vm697, 0.0, %v707
  %v711 = vsel %vm698, 0.0, %v706
  %v712 = vsel %vm699, 0.0, %v705
  %vm713 = vcmp.eq.s32.totalorder %v692, 15
  %vm714 = vcmp.eq.s32.totalorder %v693, 15
  %vm715 = vcmp.eq.s32.totalorder %v694, 15
  %vm716 = vcmp.eq.s32.totalorder %v695, 15
  %v717 = vrot.slane %v639, 1
  %v718 = vrot.slane %v640, 1
  %v719 = vrot.slane %v641, 1
  %v720 = vrot.slane %v642, 1
  %vm721 = vcmp.lt.s32.totalorder %v644, 7
  %v722 = vsel %vm721, %v719, %v720
  %v723 = vsel %vm721, %v718, %v719
  %v724 = vsel %vm721, %v717, %v718
  %v725 = vsel %vm721, %v720, %v717
  %v726 = vsel %vm713, 0.0, %v724
  %v727 = vsel %vm714, 0.0, %v723
  %v728 = vsel %vm715, 0.0, %v722
  %v729 = vsel %vm716, 0.0, %v725
  %734 = vrot.lane.b32.xlu0 %v639, 32
  %v735 = vpop.permute.xlu0 %734
  %736 = vrot.lane.b32.xlu0 %v640, 32
  %v737 = vpop.permute.xlu0 %736
  %738 = vrot.lane.b32.xlu0 %v641, 32
  %v739 = vpop.permute.xlu0 %738
  %740 = vrot.lane.b32.xlu0 %v642, 32
  %v741 = vpop.permute.xlu0 %740
  %750 = vrot.lane.b32.xlu0 %v726, 64
  %v751 = vpop.permute.xlu0 %750
  %752 = vrot.lane.b32.xlu0 %v727, 64
  %v753 = vpop.permute.xlu0 %752
  %754 = vrot.lane.b32.xlu0 %v728, 64
  %v755 = vpop.permute.xlu0 %754
  %756 = vrot.lane.b32.xlu0 %v729, 64
  %v757 = vpop.permute.xlu0 %756
  %v762 = vsel %vm164, %v709, %v735
  %v763 = vsel %vm164, %v710, %v737
  %v764 = vsel %vm164, %v711, %v739
  %v765 = vsel %vm164, %v712, %v741
  %v766 = vsel %vm174, %v762, %v751
  %v767 = vsel %vm174, %v763, %v753
  %v768 = vsel %vm174, %v764, %v755
  %v769 = vsel %vm174, %v765, %v757
  %v770 = vld [vmem:[%s10] sm:$0xff]
  %v771 = vld [vmem:[%s10 + $0x8] sm:$0xff]
  %v772 = vld [vmem:[%s10 + $0x10] sm:$0xff]
  %v773 = vld [vmem:[%s10 + $0x18] sm:$0xff]
  %v774 = vld [vmem:[%s10 + $0x20] sm:$0xff]
  %v775 = vld [vmem:[%s10 + $0x28] sm:$0xff]
  %v776 = vld [vmem:[%s10 + $0x30] sm:$0xff]
  %v777 = vld [vmem:[%s10 + $0x38] sm:$0xff]
  %v778 = vld [vmem:[%s10 + $0x40] sm:$0xff]
  %v779 = vld [vmem:[%s10 + $0x48] sm:$0xff]
  %v780 = vld [vmem:[%s10 + $0x50] sm:$0xff]
  %v781 = vld [vmem:[%s10 + $0x58] sm:$0xff]
  %v782 = vld [vmem:[%s11] sm:$0xff]
  %v783 = vld [vmem:[%s11 + $0x8] sm:$0xff]
  %v784 = vld [vmem:[%s11 + $0x10] sm:$0xff]
  %v785 = vld [vmem:[%s11 + $0x18] sm:$0xff]
  %v787 = vsel %vm184, %v766, 0
  %v790 = vsel %vm184, %v767, 0
  %v793 = vsel %vm184, %v768, 0
  %v796 = vsel %vm184, %v769, 0
  %798 = vmatpush.msra.mxu0 0.0
  %799 = vmatpush.msra.mxu0 0.0
  %800 = vmatpush.msra.mxu0 0.0
  %801 = vmatpush.msra.mxu0 0.0
  %802 = vmatpush.msra.mxu0 %v781
  %803 = vmatpush.msra.mxu0 %v780
  %804 = vmatpush.msra.mxu0 %v779
  %805 = vmatpush.msra.mxu0 %v778
  %806 = vmatpush.msra.mxu0 %v777
  %807 = vmatpush.msra.mxu0 %v776
  %808 = vmatpush.msra.mxu0 %v775
  %809 = vmatpush.msra.mxu0 %v774
  %810 = vmatpush.msra.mxu0 %v773
  %811 = vmatpush.msra.mxu0 %v772
  %812 = vmatpush.msra.mxu0 %v771
  %813 = vmatpush.msra.mxu0 %v770
  %814 = vmatmul.f32.gmra.mxu0 %v787
  %v815 = vpop.f32.mrf.mxu0
  %v816 = vadd.f32 %v782, %v815
  %817 = vmatmul.f32.gmra.mxu0 %v790
  %v818 = vpop.f32.mrf.mxu0
  %v819 = vadd.f32 %v783, %v818
  %820 = vmatmul.f32.gmra.mxu0 %v793
  %v821 = vpop.f32.mrf.mxu0
  %v822 = vadd.f32 %v784, %v821
  %823 = vmatmul.f32.gmra.mxu0 %v796
  %v824 = vpop.f32.mrf.mxu0
  %v825 = vadd.f32 %v785, %v824
  %826 = vdwg.mxu0
  %v827 = vmax.f32 %v816, 0.0
  %v828 = vmax.f32 %v819, 0.0
  %v829 = vmax.f32 %v822, 0.0
  %v830 = vmax.f32 %v825, 0.0
  %v831 = vrot.slane %v827, 7
  %v832 = vrot.slane %v828, 7
  %v833 = vrot.slane %v829, 7
  %v834 = vrot.slane %v830, 7
  %v835 = vsel %vm704, %v833, %v834
  %v836 = vsel %vm704, %v832, %v833
  %v837 = vsel %vm704, %v831, %v832
  %v838 = vsel %vm704, %v834, %v831
  %v839 = vsel %vm696, 0.0, %v838
  %v840 = vsel %vm697, 0.0, %v837
  %v841 = vsel %vm698, 0.0, %v836
  %v842 = vsel %vm699, 0.0, %v835
  %v843 = vrot.slane %v827, 1
  %v844 = vrot.slane %v828, 1
  %v845 = vrot.slane %v829, 1
  %v846 = vrot.slane %v830, 1
  %v847 = vsel %vm721, %v845, %v846
  %v848 = vsel %vm721, %v844, %v845
  %v849 = vsel %vm721, %v843, %v844
  %v850 = vsel %vm721, %v846, %v843
  %v851 = vsel %vm713, 0.0, %v849
  %v852 = vsel %vm714, 0.0, %v848
  %v853 = vsel %vm715, 0.0, %v847
  %v854 = vsel %vm716, 0.0, %v850
  %v855 = vld [vmem:[%s12] sm:$0xff]
  %v856 = vld [vmem:[%s12 + $0x8] sm:$0xff]
  %v857 = vld [vmem:[%s12 + $0x10] sm:$0xff]
  %v858 = vld [vmem:[%s12 + $0x18] sm:$0xff]
  %v859 = vld [vmem:[%s12 + $0x20] sm:$0xff]
  %v860 = vld [vmem:[%s12 + $0x28] sm:$0xff]
  %v861 = vld [vmem:[%s12 + $0x30] sm:$0xff]
  %v862 = vld [vmem:[%s12 + $0x38] sm:$0xff]
  %v863 = vld [vmem:[%s12 + $0x40] sm:$0xff]
  %v864 = vld [vmem:[%s12 + $0x48] sm:$0xff]
  %v865 = vld [vmem:[%s12 + $0x50] sm:$0xff]
  %v866 = vld [vmem:[%s12 + $0x58] sm:$0xff]
  %v867 = vld [vmem:[%s12 + $0x60] sm:$0xff]
  %v868 = vld [vmem:[%s12 + $0x68] sm:$0xff]
  %v869 = vld [vmem:[%s12 + $0x70] sm:$0xff]
  %v870 = vld [vmem:[%s12 + $0x78] sm:$0xff]
  %v871 = vld [vmem:[%s12 + $0x80] sm:$0xff]
  %v872 = vld [vmem:[%s12 + $0x88] sm:$0xff]
  %v873 = vld [vmem:[%s12 + $0x90] sm:$0xff]
  %v874 = vld [vmem:[%s12 + $0x98] sm:$0xff]
  %v875 = vld [vmem:[%s12 + $0xa0] sm:$0xff]
  %v876 = vld [vmem:[%s12 + $0xa8] sm:$0xff]
  %v877 = vld [vmem:[%s12 + $0xb0] sm:$0xff]
  %v878 = vld [vmem:[%s12 + $0xb8] sm:$0xff]
  %v879 = vld [vmem:[%s12 + $0xc0] sm:$0xff]
  %v880 = vld [vmem:[%s12 + $0xc8] sm:$0xff]
  %v881 = vld [vmem:[%s12 + $0xd0] sm:$0xff]
  %v882 = vld [vmem:[%s12 + $0xd8] sm:$0xff]
  %v883 = vld [vmem:[%s12 + $0xe0] sm:$0xff]
  %v884 = vld [vmem:[%s12 + $0xe8] sm:$0xff]
  %v885 = vld [vmem:[%s12 + $0xf0] sm:$0xff]
  %v886 = vld [vmem:[%s12 + $0xf8] sm:$0xff]
  %v887 = vld [vmem:[%s12 + $0x100] sm:$0xff]
  %v888 = vld [vmem:[%s12 + $0x108] sm:$0xff]
  %v889 = vld [vmem:[%s12 + $0x110] sm:$0xff]
  %v890 = vld [vmem:[%s12 + $0x118] sm:$0xff]
  %v891 = vld [vmem:[%s12 + $0x120] sm:$0xff]
  %v892 = vld [vmem:[%s12 + $0x128] sm:$0xff]
  %v893 = vld [vmem:[%s12 + $0x130] sm:$0xff]
  %v894 = vld [vmem:[%s12 + $0x138] sm:$0xff]
  %v895 = vld [vmem:[%s12 + $0x140] sm:$0xff]
  %v896 = vld [vmem:[%s12 + $0x148] sm:$0xff]
  %v897 = vld [vmem:[%s12 + $0x150] sm:$0xff]
  %v898 = vld [vmem:[%s12 + $0x158] sm:$0xff]
  %v899 = vld [vmem:[%s12 + $0x160] sm:$0xff]
  %v900 = vld [vmem:[%s12 + $0x168] sm:$0xff]
  %v901 = vld [vmem:[%s12 + $0x170] sm:$0xff]
  %v902 = vld [vmem:[%s12 + $0x178] sm:$0xff]
  %v903 = vld [vmem:[%s13] sm:$0xff]
  %v904 = vld [vmem:[%s13 + $0x8] sm:$0xff]
  %v905 = vld [vmem:[%s13 + $0x10] sm:$0xff]
  %v906 = vld [vmem:[%s13 + $0x18] sm:$0xff]
  %907 = vmatpush.msra.mxu0 %v870
  %908 = vmatpush.msra.mxu0 %v869
  %909 = vmatpush.msra.mxu0 %v868
  %910 = vmatpush.msra.mxu0 %v867
  %911 = vmatpush.msra.mxu0 %v866
  %912 = vmatpush.msra.mxu0 %v865
  %913 = vmatpush.msra.mxu0 %v864
  %914 = vmatpush.msra.mxu0 %v863
  %915 = vmatpush.msra.mxu0 %v862
  %916 = vmatpush.msra.mxu0 %v861
  %917 = vmatpush.msra.mxu0 %v860
  %918 = vmatpush.msra.mxu0 %v859
  %919 = vmatpush.msra.mxu0 %v858
  %920 = vmatpush.msra.mxu0 %v857
  %921 = vmatpush.msra.mxu0 %v856
  %922 = vmatpush.msra.mxu0 %v855
  %923 = vmatmul.f32.gmra.mxu0 %v839
  %v924 = vpop.f32.mrf.mxu0
  %v925 = vadd.f32 %v903, %v924
  %926 = vmatmul.f32.gmra.mxu0 %v840
  %v927 = vpop.f32.mrf.mxu0
  %v928 = vadd.f32 %v904, %v927
  %929 = vmatmul.f32.gmra.mxu0 %v841
  %v930 = vpop.f32.mrf.mxu0
  %v931 = vadd.f32 %v905, %v930
  %932 = vmatmul.f32.gmra.mxu0 %v842
  %v933 = vpop.f32.mrf.mxu0
  %v934 = vadd.f32 %v906, %v933
  %935 = vdwg.mxu0
  %936 = vmatpush.msra.mxu0 %v886
  %937 = vmatpush.msra.mxu0 %v885
  %938 = vmatpush.msra.mxu0 %v884
  %939 = vmatpush.msra.mxu0 %v883
  %940 = vmatpush.msra.mxu0 %v882
  %941 = vmatpush.msra.mxu0 %v881
  %942 = vmatpush.msra.mxu0 %v880
  %943 = vmatpush.msra.mxu0 %v879
  %944 = vmatpush.msra.mxu0 %v878
  %945 = vmatpush.msra.mxu0 %v877
  %946 = vmatpush.msra.mxu0 %v876
  %947 = vmatpush.msra.mxu0 %v875
  %948 = vmatpush.msra.mxu0 %v874
  %949 = vmatpush.msra.mxu0 %v873
  %950 = vmatpush.msra.mxu0 %v872
  %951 = vmatpush.msra.mxu0 %v871
  %952 = vmatmul.f32.gmra.mxu0 %v827
  %v953 = vpop.f32.mrf.mxu0
  %v954 = vadd.f32 %v925, %v953
  %955 = vmatmul.f32.gmra.mxu0 %v828
  %v956 = vpop.f32.mrf.mxu0
  %v957 = vadd.f32 %v928, %v956
  %958 = vmatmul.f32.gmra.mxu0 %v829
  %v959 = vpop.f32.mrf.mxu0
  %v960 = vadd.f32 %v931, %v959
  %961 = vmatmul.f32.gmra.mxu0 %v830
  %v962 = vpop.f32.mrf.mxu0
  %v963 = vadd.f32 %v934, %v962
  %964 = vdwg.mxu0
  %965 = vmatpush.msra.mxu0 %v902
  %966 = vmatpush.msra.mxu0 %v901
  %967 = vmatpush.msra.mxu0 %v900
  %968 = vmatpush.msra.mxu0 %v899
  %969 = vmatpush.msra.mxu0 %v898
  %970 = vmatpush.msra.mxu0 %v897
  %971 = vmatpush.msra.mxu0 %v896
  %972 = vmatpush.msra.mxu0 %v895
  %973 = vmatpush.msra.mxu0 %v894
  %974 = vmatpush.msra.mxu0 %v893
  %975 = vmatpush.msra.mxu0 %v892
  %976 = vmatpush.msra.mxu0 %v891
  %977 = vmatpush.msra.mxu0 %v890
  %978 = vmatpush.msra.mxu0 %v889
  %979 = vmatpush.msra.mxu0 %v888
  %980 = vmatpush.msra.mxu0 %v887
  %981 = vmatmul.f32.gmra.mxu0 %v851
  %v982 = vpop.f32.mrf.mxu0
  %v983 = vadd.f32 %v954, %v982
  %984 = vmatmul.f32.gmra.mxu0 %v852
  %v985 = vpop.f32.mrf.mxu0
  %v986 = vadd.f32 %v957, %v985
  %987 = vmatmul.f32.gmra.mxu0 %v853
  %v988 = vpop.f32.mrf.mxu0
  %v989 = vadd.f32 %v960, %v988
  %990 = vmatmul.f32.gmra.mxu0 %v854
  %v991 = vpop.f32.mrf.mxu0
  %v992 = vadd.f32 %v963, %v991
  %993 = vdwg.mxu0
  %v994 = vsub.f32 %v639, %v983
  %v995 = vsub.f32 %v640, %v986
  %v996 = vsub.f32 %v641, %v989
  %v997 = vsub.f32 %v642, %v992
  %vm998 = vcmp.gt.f32.partialorder %v816, 0.0
  %vm999 = vcmp.gt.f32.partialorder %v819, 0.0
  %vm1000 = vcmp.gt.f32.partialorder %v822, 0.0
  %vm1001 = vcmp.gt.f32.partialorder %v825, 0.0
  %v1002 = vrot.slane %v994, 7
  %v1003 = vrot.slane %v995, 7
  %v1004 = vrot.slane %v996, 7
  %v1005 = vrot.slane %v997, 7
  %v1006 = vsel %vm704, %v1004, %v1005
  %v1007 = vsel %vm704, %v1003, %v1004
  %v1008 = vsel %vm704, %v1002, %v1003
  %v1009 = vsel %vm704, %v1005, %v1002
  %v1010 = vsel %vm696, 0.0, %v1009
  %v1011 = vsel %vm697, 0.0, %v1008
  %v1012 = vsel %vm698, 0.0, %v1007
  %v1013 = vsel %vm699, 0.0, %v1006
  %v1014 = vrot.slane %v994, 1
  %v1015 = vrot.slane %v995, 1
  %v1016 = vrot.slane %v996, 1
  %v1017 = vrot.slane %v997, 1
  %v1018 = vsel %vm721, %v1016, %v1017
  %v1019 = vsel %vm721, %v1015, %v1016
  %v1020 = vsel %vm721, %v1014, %v1015
  %v1021 = vsel %vm721, %v1017, %v1014
  %v1022 = vsel %vm713, 0.0, %v1020
  %v1023 = vsel %vm714, 0.0, %v1019
  %v1024 = vsel %vm715, 0.0, %v1018
  %v1025 = vsel %vm716, 0.0, %v1021
  %1030 = vrot.lane.b32.xlu0 %v994, 32
  %v1031 = vpop.permute.xlu0 %1030
  %1032 = vrot.lane.b32.xlu0 %v995, 32
  %v1033 = vpop.permute.xlu0 %1032
  %1034 = vrot.lane.b32.xlu0 %v996, 32
  %v1035 = vpop.permute.xlu0 %1034
  %1036 = vrot.lane.b32.xlu0 %v997, 32
  %v1037 = vpop.permute.xlu0 %1036
  %1046 = vrot.lane.b32.xlu0 %v1022, 64
  %v1047 = vpop.permute.xlu0 %1046
  %1048 = vrot.lane.b32.xlu0 %v1023, 64
  %v1049 = vpop.permute.xlu0 %1048
  %1050 = vrot.lane.b32.xlu0 %v1024, 64
  %v1051 = vpop.permute.xlu0 %1050
  %1052 = vrot.lane.b32.xlu0 %v1025, 64
  %v1053 = vpop.permute.xlu0 %1052
  %v1058 = vsel %vm164, %v1010, %v1031
  %v1059 = vsel %vm164, %v1011, %v1033
  %v1060 = vsel %vm164, %v1012, %v1035
  %v1061 = vsel %vm164, %v1013, %v1037
  %v1062 = vsel %vm174, %v1058, %v1047
  %v1063 = vsel %vm174, %v1059, %v1049
  %v1064 = vsel %vm174, %v1060, %v1051
  %v1065 = vsel %vm174, %v1061, %v1053
  %v1066 = vld [vmem:[%s14] sm:$0xff]
  %v1067 = vld [vmem:[%s14 + $0x8] sm:$0xff]
  %v1068 = vld [vmem:[%s14 + $0x10] sm:$0xff]
  %v1069 = vld [vmem:[%s14 + $0x18] sm:$0xff]
  %v1070 = vld [vmem:[%s14 + $0x20] sm:$0xff]
  %v1071 = vld [vmem:[%s14 + $0x28] sm:$0xff]
  %v1072 = vld [vmem:[%s14 + $0x30] sm:$0xff]
  %v1073 = vld [vmem:[%s14 + $0x38] sm:$0xff]
  %v1074 = vld [vmem:[%s14 + $0x40] sm:$0xff]
  %v1075 = vld [vmem:[%s14 + $0x48] sm:$0xff]
  %v1076 = vld [vmem:[%s14 + $0x50] sm:$0xff]
  %v1077 = vld [vmem:[%s14 + $0x58] sm:$0xff]
  %v1079 = vsel %vm184, %v1062, 0
  %v1082 = vsel %vm184, %v1063, 0
  %v1085 = vsel %vm184, %v1064, 0
  %v1088 = vsel %vm184, %v1065, 0
  %1090 = vmatpush.msra.mxu0 0.0
  %1091 = vmatpush.msra.mxu0 0.0
  %1092 = vmatpush.msra.mxu0 0.0
  %1093 = vmatpush.msra.mxu0 0.0
  %1094 = vmatpush.msra.mxu0 %v1077
  %1095 = vmatpush.msra.mxu0 %v1076
  %1096 = vmatpush.msra.mxu0 %v1075
  %1097 = vmatpush.msra.mxu0 %v1074
  %1098 = vmatpush.msra.mxu0 %v1073
  %1099 = vmatpush.msra.mxu0 %v1072
  %1100 = vmatpush.msra.mxu0 %v1071
  %1101 = vmatpush.msra.mxu0 %v1070
  %1102 = vmatpush.msra.mxu0 %v1069
  %1103 = vmatpush.msra.mxu0 %v1068
  %1104 = vmatpush.msra.mxu0 %v1067
  %1105 = vmatpush.msra.mxu0 %v1066
  %1106 = vmatmul.f32.gmra.mxu0 %v1079
  %v1107 = vpop.f32.mrf.mxu0
  %v1108 = vadd.f32 0.0, %v1107
  %1109 = vmatmul.f32.gmra.mxu0 %v1082
  %v1110 = vpop.f32.mrf.mxu0
  %v1111 = vadd.f32 0.0, %v1110
  %1112 = vmatmul.f32.gmra.mxu0 %v1085
  %v1113 = vpop.f32.mrf.mxu0
  %v1114 = vadd.f32 0.0, %v1113
  %1115 = vmatmul.f32.gmra.mxu0 %v1088
  %v1116 = vpop.f32.mrf.mxu0
  %v1117 = vadd.f32 0.0, %v1116
  %1118 = vdwg.mxu0
  %v1119 = vsel %vm998, %v1108, 0.0
  %v1120 = vsel %vm999, %v1111, 0.0
  %v1121 = vsel %vm1000, %v1114, 0.0
  %v1122 = vsel %vm1001, %v1117, 0.0
  %v1123 = vrot.slane %v1119, 7
  %v1124 = vrot.slane %v1120, 7
  %v1125 = vrot.slane %v1121, 7
  %v1126 = vrot.slane %v1122, 7
  %v1127 = vsel %vm704, %v1125, %v1126
  %v1128 = vsel %vm704, %v1124, %v1125
  %v1129 = vsel %vm704, %v1123, %v1124
  %v1130 = vsel %vm704, %v1126, %v1123
  %v1131 = vsel %vm696, 0.0, %v1130
  %v1132 = vsel %vm697, 0.0, %v1129
  %v1133 = vsel %vm698, 0.0, %v1128
  %v1134 = vsel %vm699, 0.0, %v1127
  %v1135 = vrot.slane %v1119, 1
  %v1136 = vrot.slane %v1120, 1
  %v1137 = vrot.slane %v1121, 1
  %v1138 = vrot.slane %v1122, 1
  %v1139 = vsel %vm721, %v1137, %v1138
  %v1140 = vsel %vm721, %v1136, %v1137
  %v1141 = vsel %vm721, %v1135, %v1136
  %v1142 = vsel %vm721, %v1138, %v1135
  %v1143 = vsel %vm713, 0.0, %v1141
  %v1144 = vsel %vm714, 0.0, %v1140
  %v1145 = vsel %vm715, 0.0, %v1139
  %v1146 = vsel %vm716, 0.0, %v1142
  %v1147 = vld [vmem:[%s15] sm:$0xff]
  %v1148 = vld [vmem:[%s15 + $0x8] sm:$0xff]
  %v1149 = vld [vmem:[%s15 + $0x10] sm:$0xff]
  %v1150 = vld [vmem:[%s15 + $0x18] sm:$0xff]
  %v1151 = vld [vmem:[%s15 + $0x20] sm:$0xff]
  %v1152 = vld [vmem:[%s15 + $0x28] sm:$0xff]
  %v1153 = vld [vmem:[%s15 + $0x30] sm:$0xff]
  %v1154 = vld [vmem:[%s15 + $0x38] sm:$0xff]
  %v1155 = vld [vmem:[%s15 + $0x40] sm:$0xff]
  %v1156 = vld [vmem:[%s15 + $0x48] sm:$0xff]
  %v1157 = vld [vmem:[%s15 + $0x50] sm:$0xff]
  %v1158 = vld [vmem:[%s15 + $0x58] sm:$0xff]
  %v1159 = vld [vmem:[%s15 + $0x60] sm:$0xff]
  %v1160 = vld [vmem:[%s15 + $0x68] sm:$0xff]
  %v1161 = vld [vmem:[%s15 + $0x70] sm:$0xff]
  %v1162 = vld [vmem:[%s15 + $0x78] sm:$0xff]
  %v1163 = vld [vmem:[%s15 + $0x80] sm:$0xff]
  %v1164 = vld [vmem:[%s15 + $0x88] sm:$0xff]
  %v1165 = vld [vmem:[%s15 + $0x90] sm:$0xff]
  %v1166 = vld [vmem:[%s15 + $0x98] sm:$0xff]
  %v1167 = vld [vmem:[%s15 + $0xa0] sm:$0xff]
  %v1168 = vld [vmem:[%s15 + $0xa8] sm:$0xff]
  %v1169 = vld [vmem:[%s15 + $0xb0] sm:$0xff]
  %v1170 = vld [vmem:[%s15 + $0xb8] sm:$0xff]
  %v1171 = vld [vmem:[%s15 + $0xc0] sm:$0xff]
  %v1172 = vld [vmem:[%s15 + $0xc8] sm:$0xff]
  %v1173 = vld [vmem:[%s15 + $0xd0] sm:$0xff]
  %v1174 = vld [vmem:[%s15 + $0xd8] sm:$0xff]
  %v1175 = vld [vmem:[%s15 + $0xe0] sm:$0xff]
  %v1176 = vld [vmem:[%s15 + $0xe8] sm:$0xff]
  %v1177 = vld [vmem:[%s15 + $0xf0] sm:$0xff]
  %v1178 = vld [vmem:[%s15 + $0xf8] sm:$0xff]
  %v1179 = vld [vmem:[%s15 + $0x100] sm:$0xff]
  %v1180 = vld [vmem:[%s15 + $0x108] sm:$0xff]
  %v1181 = vld [vmem:[%s15 + $0x110] sm:$0xff]
  %v1182 = vld [vmem:[%s15 + $0x118] sm:$0xff]
  %v1183 = vld [vmem:[%s15 + $0x120] sm:$0xff]
  %v1184 = vld [vmem:[%s15 + $0x128] sm:$0xff]
  %v1185 = vld [vmem:[%s15 + $0x130] sm:$0xff]
  %v1186 = vld [vmem:[%s15 + $0x138] sm:$0xff]
  %v1187 = vld [vmem:[%s15 + $0x140] sm:$0xff]
  %v1188 = vld [vmem:[%s15 + $0x148] sm:$0xff]
  %v1189 = vld [vmem:[%s15 + $0x150] sm:$0xff]
  %v1190 = vld [vmem:[%s15 + $0x158] sm:$0xff]
  %v1191 = vld [vmem:[%s15 + $0x160] sm:$0xff]
  %v1192 = vld [vmem:[%s15 + $0x168] sm:$0xff]
  %v1193 = vld [vmem:[%s15 + $0x170] sm:$0xff]
  %v1194 = vld [vmem:[%s15 + $0x178] sm:$0xff]
  %1195 = vmatpush.msra.mxu0 %v1162
  %1196 = vmatpush.msra.mxu0 %v1161
  %1197 = vmatpush.msra.mxu0 %v1160
  %1198 = vmatpush.msra.mxu0 %v1159
  %1199 = vmatpush.msra.mxu0 %v1158
  %1200 = vmatpush.msra.mxu0 %v1157
  %1201 = vmatpush.msra.mxu0 %v1156
  %1202 = vmatpush.msra.mxu0 %v1155
  %1203 = vmatpush.msra.mxu0 %v1154
  %1204 = vmatpush.msra.mxu0 %v1153
  %1205 = vmatpush.msra.mxu0 %v1152
  %1206 = vmatpush.msra.mxu0 %v1151
  %1207 = vmatpush.msra.mxu0 %v1150
  %1208 = vmatpush.msra.mxu0 %v1149
  %1209 = vmatpush.msra.mxu0 %v1148
  %1210 = vmatpush.msra.mxu0 %v1147
  %1211 = vmatmul.f32.gmra.mxu0 %v1131
  %v1212 = vpop.f32.mrf.mxu0
  %v1213 = vadd.f32 0.0, %v1212
  %1214 = vmatmul.f32.gmra.mxu0 %v1132
  %v1215 = vpop.f32.mrf.mxu0
  %v1216 = vadd.f32 0.0, %v1215
  %1217 = vmatmul.f32.gmra.mxu0 %v1133
  %v1218 = vpop.f32.mrf.mxu0
  %v1219 = vadd.f32 0.0, %v1218
  %1220 = vmatmul.f32.gmra.mxu0 %v1134
  %v1221 = vpop.f32.mrf.mxu0
  %v1222 = vadd.f32 0.0, %v1221
  %1223 = vdwg.mxu0
  %1224 = vmatpush.msra.mxu0 %v1178
  %1225 = vmatpush.msra.mxu0 %v1177
  %1226 = vmatpush.msra.mxu0 %v1176
  %1227 = vmatpush.msra.mxu0 %v1175
  %1228 = vmatpush.msra.mxu0 %v1174
  %1229 = vmatpush.msra.mxu0 %v1173
  %1230 = vmatpush.msra.mxu0 %v1172
  %1231 = vmatpush.msra.mxu0 %v1171
  %1232 = vmatpush.msra.mxu0 %v1170
  %1233 = vmatpush.msra.mxu0 %v1169
  %1234 = vmatpush.msra.mxu0 %v1168
  %1235 = vmatpush.msra.mxu0 %v1167
  %1236 = vmatpush.msra.mxu0 %v1166
  %1237 = vmatpush.msra.mxu0 %v1165
  %1238 = vmatpush.msra.mxu0 %v1164
  %1239 = vmatpush.msra.mxu0 %v1163
  %1240 = vmatmul.f32.gmra.mxu0 %v1119
  %v1241 = vpop.f32.mrf.mxu0
  %v1242 = vadd.f32 %v1213, %v1241
  %1243 = vmatmul.f32.gmra.mxu0 %v1120
  %v1244 = vpop.f32.mrf.mxu0
  %v1245 = vadd.f32 %v1216, %v1244
  %1246 = vmatmul.f32.gmra.mxu0 %v1121
  %v1247 = vpop.f32.mrf.mxu0
  %v1248 = vadd.f32 %v1219, %v1247
  %1249 = vmatmul.f32.gmra.mxu0 %v1122
  %v1250 = vpop.f32.mrf.mxu0
  %v1251 = vadd.f32 %v1222, %v1250
  %1252 = vdwg.mxu0
  %1253 = vmatpush.msra.mxu0 %v1194
  %1254 = vmatpush.msra.mxu0 %v1193
  %1255 = vmatpush.msra.mxu0 %v1192
  %1256 = vmatpush.msra.mxu0 %v1191
  %1257 = vmatpush.msra.mxu0 %v1190
  %1258 = vmatpush.msra.mxu0 %v1189
  %1259 = vmatpush.msra.mxu0 %v1188
  %1260 = vmatpush.msra.mxu0 %v1187
  %1261 = vmatpush.msra.mxu0 %v1186
  %1262 = vmatpush.msra.mxu0 %v1185
  %1263 = vmatpush.msra.mxu0 %v1184
  %1264 = vmatpush.msra.mxu0 %v1183
  %1265 = vmatpush.msra.mxu0 %v1182
  %1266 = vmatpush.msra.mxu0 %v1181
  %1267 = vmatpush.msra.mxu0 %v1180
  %1268 = vmatpush.msra.mxu0 %v1179
  %1269 = vmatmul.f32.gmra.mxu0 %v1143
  %v1270 = vpop.f32.mrf.mxu0
  %v1271 = vadd.f32 %v1242, %v1270
  %1272 = vmatmul.f32.gmra.mxu0 %v1144
  %v1273 = vpop.f32.mrf.mxu0
  %v1274 = vadd.f32 %v1245, %v1273
  %1275 = vmatmul.f32.gmra.mxu0 %v1145
  %v1276 = vpop.f32.mrf.mxu0
  %v1277 = vadd.f32 %v1248, %v1276
  %1278 = vmatmul.f32.gmra.mxu0 %v1146
  %v1279 = vpop.f32.mrf.mxu0
  %v1280 = vadd.f32 %v1251, %v1279
  %1281 = vdwg.mxu0
  %v1282 = vsub.f32 %v994, %v1271
  %v1283 = vsub.f32 %v995, %v1274
  %v1284 = vsub.f32 %v996, %v1277
  %v1285 = vsub.f32 %v997, %v1280
  %v1286 = vmul.f32 %v1282, 0.5
  %v1287 = vmul.f32 %v1283, 0.5
  %v1288 = vmul.f32 %v1284, 0.5
  %v1289 = vmul.f32 %v1285, 0.5
  %v1290 = vsub.f32 %v639, %v1286
  %v1291 = vsub.f32 %v640, %v1287
  %v1292 = vsub.f32 %v641, %v1288
  %v1293 = vsub.f32 %v642, %v1289
  %1294 = vst.msk [vmem:[%s16] sm:$0xff] %vm164, %v1290
  %1295 = vst.msk [vmem:[%s16 + $0x8] sm:$0xff] %vm164, %v1291
  %1296 = vst.msk [vmem:[%s16 + $0x10] sm:$0xff] %vm164, %v1292
  %1297 = vst.msk [vmem:[%s16 + $0x18] sm:$0xff] %vm164, %v1293
  %v1298 = vmul.f32 %v994, %v994
  %v1299 = vmul.f32 %v995, %v995
  %v1300 = vmul.f32 %v996, %v996
  %v1301 = vmul.f32 %v997, %v997
  %v1302 = vsel %vm164, %v1298, 0.0
  %v1303 = vsel %vm164, %v1299, 0.0
  %v1304 = vadd.f32 %v1302, %v1303
  %v1305 = vsel %vm164, %v1300, 0.0
  %v1306 = vadd.f32 %v1304, %v1305
  %v1307 = vsel %vm164, %v1301, 0.0
  %v1308 = vadd.f32 %v1306, %v1307
  %1309 = vadd.xlane.f32.xlu0 %v1308
  %v1310 = vpop.xlane.xlu0 %1309
  %v1311 = vrot.slane %v1310, 4
  %v1312 = vadd.f32 %v1310, %v1311
  %v1313 = vrot.slane %v1312, 2
  %v1314 = vadd.f32 %v1312, %v1313
  %v1315 = vrot.slane %v1314, 1
  %v1316 = vadd.f32 %v1314, %v1315
  %s1317 = vtos %v1316
  %s1318 = smul.f32 %s1317, 0.5
  %v1319 = vmul.f32 %v1282, %v1282
  %v1320 = vmul.f32 %v1283, %v1283
  %v1321 = vmul.f32 %v1284, %v1284
  %v1322 = vmul.f32 %v1285, %v1285
  %v1323 = vsel %vm164, %v1319, 0.0
  %v1324 = vsel %vm164, %v1320, 0.0
  %v1325 = vadd.f32 %v1323, %v1324
  %v1326 = vsel %vm164, %v1321, 0.0
  %v1327 = vadd.f32 %v1325, %v1326
  %v1328 = vsel %vm164, %v1322, 0.0
  %v1329 = vadd.f32 %v1327, %v1328
  %1330 = vadd.xlane.f32.xlu0 %v1329
  %v1331 = vpop.xlane.xlu0 %1330
  %v1332 = vrot.slane %v1331, 4
  %v1333 = vadd.f32 %v1331, %v1332
  %v1334 = vrot.slane %v1333, 2
  %v1335 = vadd.f32 %v1333, %v1334
  %v1336 = vrot.slane %v1335, 1
  %v1337 = vadd.f32 %v1335, %v1336
  %s1338 = vtos %v1337
  %s1339 = smul.f32 %s1338, 0.125
  %vm1340 = vcmp.eq.s32.totalorder %v235, 0
  %v1341 = vstv %s413
  %v1342 = vsel %vm1340, %v1341, 0.0
  %vm1343 = vcmp.eq.s32.totalorder %v235, 1
  %v1344 = vstv %s1318
  %v1345 = vsel %vm1343, %v1344, 0.0
  %v1346 = vadd.f32 %v1342, %v1345
  %vm1347 = vcmp.eq.s32.totalorder %v235, 2
  %v1348 = vstv %s1339
  %v1349 = vsel %vm1347, %v1348, 0.0
  %v1350 = vadd.f32 %v1346, %v1349
  %1351 = vst [vmem:[%s17] sm:$0x1] %v1350
  // Predicated region
  $region66: #{image_update_bls.1} parent=0 // pred_check
    _
  $region67: #{image_update_bls.1} parent=0 // pred_check_branch
    %1353 = sbr.rel (0) target = $region69
  $region68: #{image_update_bls.1} parent=0 // pred_region
    _
  $region69: #{image_update_bls.1} parent=0 // pred_fallthru
    _
  // Predicated region
  $region70: #{image_update_bls.1} parent=0 // pred_check
    _
  $region71: #{image_update_bls.1} parent=0 // pred_check_branch
    %1355 = sbr.rel (0) target = $region73
  $region72: #{image_update_bls.1} parent=0 // pred_region
    _
  $region73: #{image_update_bls.1} parent=0 // pred_fallthru
    _
  // Predicated region
  $region74: #{image_update_bls.1} parent=0 // pred_check
    _
  $region75: #{image_update_bls.1} parent=0 // pred_check_branch
    %1357 = sbr.rel (0) target = $region77
  $region76: #{image_update_bls.1} parent=0 // pred_region
    _
  $region77: #{image_update_bls.1} parent=0 // pred_fallthru
    _
  // Predicated region
  $region78: #{image_update_bls.1} parent=0 // pred_check
    _
  $region79: #{image_update_bls.1} parent=0 // pred_check_branch
    %1359 = sbr.rel (0) target = $region81
  $region80: #{image_update_bls.1} parent=0 // pred_region
    _
  $region81: #{image_update_bls.1} parent=0 // pred_fallthru
    _

</llo_original>
